<compile_context>
chip_gen: v7x
topology: tpu7x:2x2x1
jax: 0.10.0
libtpu: 0.0.40
codegen_flags: <defaults>
</compile_context>

<pallas_src>
import functools

import jax
import jax.numpy as jnp
from jax.experimental import pallas as pl
from jax.experimental.pallas import tpu as pltpu


# ----------------------------- kernels --------------------------------------


def _masked_log_softmax(z, c_out):
    """Row-wise log_softmax over the first c_out (valid) lanes of z (f32)."""
    col = jax.lax.broadcasted_iota(jnp.int32, z.shape, 1)
    valid = col < c_out
    zm = jnp.where(valid, z, jnp.float32(-1e30))
    m = jnp.max(zm, axis=-1, keepdims=True)
    e = jnp.where(valid, jnp.exp(zm - m), 0.0)
    lse = jnp.log(jnp.sum(e, axis=-1, keepdims=True))
    return jnp.where(valid, zm - m - lse, 0.0)


def _layer1_kernel(b_ref, xs_ref, dinv_ref, w1_ref, b1_ref, w2_ref, g_ref, acc_ref):
    """Gs = dinv * (relu((dinv * (B @ Xs)) @ W1 + b1) @ W2_pad).

    B is the binary (A+I) streamed as int8; Xs = dinv * X (bf16); accumulation
    over the node/contraction axis (grid axis 1).
    """
    k = pl.program_id(1)

    @pl.when(k == 0)
    def _():
        acc_ref[...] = jnp.zeros_like(acc_ref)

    # int8 -> bf16 widen is exact for 0/1; MXU runs bf16 x bf16 with f32 acc.
    acc_ref[...] += jnp.dot(b_ref[...].astype(jnp.bfloat16), xs_ref[...],
                            preferred_element_type=jnp.float32)

    @pl.when(k == pl.num_programs(1) - 1)
    def _():
        dinv = dinv_ref[...]                                   # (tm, 1) f32
        h = jnp.dot((dinv * acc_ref[...]).astype(jnp.bfloat16), w1_ref[...],
                    preferred_element_type=jnp.float32) + b1_ref[...]
        h = jnp.maximum(h, 0.0)                                # ReLU
        # TODO(synk): dropout implemented as eval-mode identity (training=False);
        #             training-mode PRNG mask not emitted.
        # Fuse the W2 projection + the layer-2 input row-scale here so layer 2
        # streams only C_out (padded) columns.
        g = jnp.dot(h.astype(jnp.bfloat16), w2_ref[...],
                    preferred_element_type=jnp.float32)
        g_ref[...] = (dinv * g).astype(g_ref.dtype)


def _layer2_kernel(b_ref, gs_ref, dinv_ref, b2_ref, o_ref, acc_ref, *, c_out):
    """out = log_softmax(dinv * (B @ Gs) + b2) over the first c_out lanes."""
    k = pl.program_id(1)

    @pl.when(k == 0)
    def _():
        acc_ref[...] = jnp.zeros_like(acc_ref)

    acc_ref[...] += jnp.dot(b_ref[...].astype(jnp.bfloat16), gs_ref[...],
                            preferred_element_type=jnp.float32)

    @pl.when(k == pl.num_programs(1) - 1)
    def _():
        z = dinv_ref[...] * acc_ref[...] + b2_ref[...]
        o_ref[...] = _masked_log_softmax(z, c_out)


def _fused_kernel(b_ref, xs_ref, dinv_ref, w1_ref, b1_ref, w2_ref, b2_ref,
                  o_ref, *, c_out):
    """Both GCN layers in one launch: A streamed from HBM once, G stays in VMEM."""
    a = b_ref[...].astype(jnp.bfloat16)                        # binary, exact
    dinv = dinv_ref[...]                                       # (n_pad, 1) f32

    acc1 = jnp.dot(a, xs_ref[...], preferred_element_type=jnp.float32)
    h = jnp.dot((dinv * acc1).astype(jnp.bfloat16), w1_ref[...],
                preferred_element_type=jnp.float32) + b1_ref[...]
    h = jnp.maximum(h, 0.0)                                    # ReLU
    # TODO(synk): dropout is eval-mode identity here as well.
    gs = dinv * jnp.dot(h.astype(jnp.bfloat16), w2_ref[...],
                        preferred_element_type=jnp.float32)
    z = dinv * jnp.dot(a, gs.astype(jnp.bfloat16),
                       preferred_element_type=jnp.float32) + b2_ref[...]
    o_ref[...] = _masked_log_softmax(z, c_out)


# ----------------------------- wrapper ---------------------------------------


def _pick_tile(n_pad, candidates, min_tiles=1):
    """Largest candidate tile that divides n_pad with at least min_tiles tiles."""
    for t in candidates:
        if n_pad % t == 0 and n_pad // t >= min_tiles:
            return t
    return candidates[-1]


def gcn_forward(adj_bin, dinv, x, w1, b1, w2, b2, *, fuse_threshold=1024):
    """Forward pass of the 2-layer GCN.

    adj_bin : (N, N) binary (A + I), any integer/float dtype (values 0/1).
    dinv    : (N,) D^-1/2 with degrees computed on (A + I).
    """
    n, c_in = x.shape
    hidden = w1.shape[1]
    c_out = w2.shape[1]
    c_pad = 128 * ((c_out + 127) // 128)            # lane-dense output width
    n_pad = 256 * pl.cdiv(n, 256)                   # pad node count (tiling + megacore)

    # Padded / pre-scaled operands.  The adjacency stream is int8 (0/1 exact).
    b_pad = jnp.zeros((n_pad, n_pad), jnp.int8).at[:n, :n].set(adj_bin.astype(jnp.int8))
    dinv_col = jnp.zeros((n_pad, 1), jnp.float32).at[:n, 0].set(dinv.astype(jnp.float32))
    xs = dinv.astype(jnp.float32)[:, None] * x.astype(jnp.float32)
    xs_pad = jnp.zeros((n_pad, c_in), jnp.bfloat16).at[:n, :].set(xs.astype(jnp.bfloat16))
    w1b = w1.astype(jnp.bfloat16)
    b1f = b1.reshape(1, hidden).astype(jnp.float32)
    w2b = jnp.zeros((hidden, c_pad), jnp.bfloat16).at[:, :c_out].set(w2.astype(jnp.bfloat16))
    b2f = jnp.zeros((1, c_pad), jnp.float32).at[:, :c_out].set(
        b2.reshape(1, c_out).astype(jnp.float32))

    vmem_limit = 48 * 1024 * 1024   # well under v7x's 64 MiB physical VMEM

    # ---------------- fused single-launch path (small graphs) ----------------
    if n_pad <= fuse_threshold:
        out_pad = pl.pallas_call(
            functools.partial(_fused_kernel, c_out=c_out),
            out_shape=jax.ShapeDtypeStruct((n_pad, c_pad), jnp.float32),
            grid_spec=pltpu.PrefetchScalarGridSpec(
                num_scalar_prefetch=0,
                grid=(1,),
                in_specs=[
                    pl.BlockSpec((n_pad, n_pad), lambda i: (0, 0)),    # B (int8)
                    pl.BlockSpec((n_pad, c_in), lambda i: (0, 0)),     # Xs (bf16)
                    pl.BlockSpec((n_pad, 1), lambda i: (0, 0)),        # dinv
                    pl.BlockSpec((c_in, hidden), lambda i: (0, 0)),    # W1 (bf16)
                    pl.BlockSpec((1, hidden), lambda i: (0, 0)),       # b1
                    pl.BlockSpec((hidden, c_pad), lambda i: (0, 0)),   # W2 (bf16, padded)
                    pl.BlockSpec((1, c_pad), lambda i: (0, 0)),        # b2 (padded)
                ],
                out_specs=pl.BlockSpec((n_pad, c_pad), lambda i: (0, 0)),
            ),
            compiler_params=pltpu.CompilerParams(
                dimension_semantics=("arbitrary",),
                vmem_limit_bytes=vmem_limit,
            ),
        )(b_pad, xs_pad, dinv_col, w1b, b1f, w2b, b2f)
        return out_pad[:n, :c_out]

    # ---------------------------- tiled path ---------------------------------
    # >=2 row tiles so both v7x TensorCores get work on the "parallel" axis.
    tm = _pick_tile(n_pad, (1024, 512, 256, 128), min_tiles=2)
    tk = _pick_tile(n_pad, (1024, 512, 256), min_tiles=1)
    grid = (n_pad // tm, n_pad // tk)

    cparams = pltpu.CompilerParams(
        dimension_semantics=("parallel", "arbitrary"),
        vmem_limit_bytes=vmem_limit,
    )

    # ---- layer 1:  Gs = dinv * (relu((dinv * (B @ Xs)) @ W1 + b1) @ W2) ----
    gs = pl.pallas_call(
        _layer1_kernel,
        out_shape=jax.ShapeDtypeStruct((n_pad, c_pad), jnp.bfloat16),
        grid_spec=pltpu.PrefetchScalarGridSpec(
            num_scalar_prefetch=0,
            grid=grid,
            in_specs=[
                pl.BlockSpec((tm, tk), lambda i, k: (i, k)),         # B (int8)
                pl.BlockSpec((tk, c_in), lambda i, k: (k, 0)),       # Xs (bf16)
                pl.BlockSpec((tm, 1), lambda i, k: (i, 0)),          # dinv rows
                pl.BlockSpec((c_in, hidden), lambda i, k: (0, 0)),   # W1 (resident)
                pl.BlockSpec((1, hidden), lambda i, k: (0, 0)),      # b1
                pl.BlockSpec((hidden, c_pad), lambda i, k: (0, 0)),  # W2 (padded)
            ],
            out_specs=pl.BlockSpec((tm, c_pad), lambda i, k: (i, 0)),
            scratch_shapes=[pltpu.VMEM((tm, c_in), jnp.float32)],
        ),
        compiler_params=cparams,
        cost_estimate=pl.CostEstimate(
            flops=2 * n_pad * n_pad * c_in + 2 * n_pad * c_in * hidden
                  + 2 * n_pad * hidden * c_pad,
            transcendentals=0,
            bytes_accessed=n_pad * n_pad + 2 * n_pad * c_in + 2 * n_pad * c_pad,
        ),
    )(b_pad, xs_pad, dinv_col, w1b, b1f, w2b)

    # ---- layer 2:  out = log_softmax(dinv * (B @ Gs) + b2) ----
    out_pad = pl.pallas_call(
        functools.partial(_layer2_kernel, c_out=c_out),
        out_shape=jax.ShapeDtypeStruct((n_pad, c_pad), jnp.float32),
        grid_spec=pltpu.PrefetchScalarGridSpec(
            num_scalar_prefetch=0,
            grid=grid,
            in_specs=[
                pl.BlockSpec((tm, tk), lambda i, k: (i, k)),      # B (int8)
                pl.BlockSpec((tk, c_pad), lambda i, k: (k, 0)),   # Gs (bf16)
                pl.BlockSpec((tm, 1), lambda i, k: (i, 0)),       # dinv rows
                pl.BlockSpec((1, c_pad), lambda i, k: (0, 0)),    # b2 (padded)
            ],
            out_specs=pl.BlockSpec((tm, c_pad), lambda i, k: (i, 0)),
            scratch_shapes=[pltpu.VMEM((tm, c_pad), jnp.float32)],
        ),
        compiler_params=cparams,
        cost_estimate=pl.CostEstimate(
            flops=2 * n_pad * n_pad * c_pad,
            transcendentals=n_pad * c_pad,
            bytes_accessed=n_pad * n_pad + 2 * n_pad * c_pad + 4 * n_pad * c_pad,
        ),
    )(b_pad, gs, dinv_col, b2f)

    return out_pad[:n, :c_out]


# --------------------------- graph glue (plain JAX) ---------------------------


def build_graph(edge_index, num_nodes):
    """Binary (A + I) and D^-1/2 for GCN normalization, with A[dst, src] = 1.

    Matches PyG gcn_norm's directed (source->target) aggregation with in-degree
    based symmetric normalization.  Duplicate edges are collapsed to 1.
    """
    src, dst = edge_index[0], edge_index[1]
    a = jnp.zeros((num_nodes, num_nodes), jnp.float32)
    a = a.at[dst, src].set(1.0)                                 # message src -> dst
    a = jnp.maximum(a, jnp.eye(num_nodes, dtype=jnp.float32))   # add self loops
    deg = jnp.sum(a, axis=1)                                    # in-degree (+ self)
    dinv = jnp.where(deg > 0, jax.lax.rsqrt(deg), 0.0)
    return a.astype(jnp.int8), dinv


def gcn_reference(adj_bin, dinv, x, w1, b1, w2, b2):
    """Plain-JAX reference mirroring the kernel's bf16-quantized HBM streams."""
    bq = adj_bin.astype(jnp.float32)
    d = dinv.astype(jnp.float32)[:, None]
    xs_q = (d * x).astype(jnp.bfloat16).astype(jnp.float32)
    h = jnp.maximum((d * (bq @ xs_q)) @ w1 + b1[None, :], 0.0)
    gs_q = (d * (h @ w2)).astype(jnp.bfloat16).astype(jnp.float32)
    z = d * (bq @ gs_q) + b2[None, :]
    return jax.nn.log_softmax(z, axis=1)


# ------------------------------ demo / test -----------------------------------


if __name__ == "__main__":
    in_channels, hidden_channels, out_channels = 16, 32, 8

    def make_case(key, num_nodes, num_edges):
        k_x, k_e0, k_e1, k_w1, k_b1, k_w2, k_b2 = jax.random.split(key, 7)
        x = jax.random.normal(k_x, (num_nodes, in_channels), jnp.float32)
        edge_index = jnp.stack([
            jax.random.randint(k_e0, (num_edges,), 0, num_nodes),
            jax.random.randint(k_e1, (num_edges,), 0, num_nodes),
        ])
        w1 = (jax.random.normal(k_w1, (in_channels, hidden_channels), jnp.float32)
              * jnp.sqrt(2.0 / (in_channels + hidden_channels)))
        b1 = 0.1 * jax.random.normal(k_b1, (hidden_channels,), jnp.float32)
        w2 = (jax.random.normal(k_w2, (hidden_channels, out_channels), jnp.float32)
              * jnp.sqrt(2.0 / (hidden_channels + out_channels)))
        b2 = 0.1 * jax.random.normal(k_b2, (out_channels,), jnp.float32)
        return x, edge_index, w1, b1, w2, b2

    key = jax.random.PRNGKey(0)
    k1, k2 = jax.random.split(key)

    # Case 1: demo-sized graph -> fused single-launch path.
    n1 = 128
    x, ei, w1, b1, w2, b2 = make_case(k1, n1, 256)
    adj, dinv = build_graph(ei, n1)
    out = jax.block_until_ready(gcn_forward(adj, dinv, x, w1, b1, w2, b2))
    assert out.shape == (n1, out_channels)
    assert bool(jnp.all(jnp.abs(jnp.sum(jnp.exp(out), axis=1) - 1.0) < 1e-4))
    ref = gcn_reference(adj, dinv, x, w1, b1, w2, b2)
    assert bool(jnp.max(jnp.abs(out - ref)) < 5e-2)

    # Case 2: non-aligned node count -> padded, tiled, two-launch path (forced).
    n2 = 600
    x, ei, w1, b1, w2, b2 = make_case(k2, n2, 2400)
    adj, dinv = build_graph(ei, n2)
    out = jax.block_until_ready(
        gcn_forward(adj, dinv, x, w1, b1, w2, b2, fuse_threshold=0))
    assert out.shape == (n2, out_channels)
    assert bool(jnp.all(jnp.abs(jnp.sum(jnp.exp(out), axis=1) - 1.0) < 1e-4))
    ref = gcn_reference(adj, dinv, x, w1, b1, w2, b2)
    assert bool(jnp.max(jnp.abs(out - ref)) < 5e-2)

    print("KERNEL_OK")
</pallas_src>

<mosaic_0001>
module attributes {stable_mosaic.version = 11 : i64} {
  func.func @_fused_kernel(%arg0: i32, %arg1: memref<256x256xi8, #tpu.memory_space<vmem>>, %arg2: memref<256x16xbf16, #tpu.memory_space<vmem>>, %arg3: memref<256x1xf32, #tpu.memory_space<vmem>>, %arg4: memref<16x32xbf16, #tpu.memory_space<vmem>>, %arg5: memref<1x32xf32, #tpu.memory_space<vmem>>, %arg6: memref<32x128xbf16, #tpu.memory_space<vmem>>, %arg7: memref<1x128xf32, #tpu.memory_space<vmem>>, %arg8: memref<256x128xf32, #tpu.memory_space<vmem>>) attributes {dimension_semantics = [#tpu.dimension_semantics<arbitrary>], iteration_bounds = array<i64: 1>, scalar_prefetch = 0 : i64, scratch_operands = 0 : i64, tpu.core_type = #tpu.core_type<tc>, window_params = [{pipeline_mode = #tpu.pipeline_mode<synchronous>, transform_indices = @transform_0, window_bounds = array<i64: 256, 256>}, {pipeline_mode = #tpu.pipeline_mode<synchronous>, transform_indices = @transform_1, window_bounds = array<i64: 256, 16>}, {pipeline_mode = #tpu.pipeline_mode<synchronous>, transform_indices = @transform_2, window_bounds = array<i64: 256, 1>}, {pipeline_mode = #tpu.pipeline_mode<synchronous>, transform_indices = @transform_3, window_bounds = array<i64: 16, 32>}, {pipeline_mode = #tpu.pipeline_mode<synchronous>, transform_indices = @transform_4, window_bounds = array<i64: 1, 32>}, {pipeline_mode = #tpu.pipeline_mode<synchronous>, transform_indices = @transform_5, window_bounds = array<i64: 32, 128>}, {pipeline_mode = #tpu.pipeline_mode<synchronous>, transform_indices = @transform_6, window_bounds = array<i64: 1, 128>}, {pipeline_mode = #tpu.pipeline_mode<synchronous>, transform_indices = @transform_7, window_bounds = array<i64: 256, 128>}]} {
    %c0 = arith.constant 0 : index
    %c0_0 = arith.constant 0 : index
    %0 = vector.load %arg1[%c0, %c0_0] : memref<256x256xi8, #tpu.memory_space<vmem>>, vector<256x256xi8>
    %1 = arith.sitofp %0 : vector<256x256xi8> to vector<256x256xbf16>
    %c0_1 = arith.constant 0 : index
    %c0_2 = arith.constant 0 : index
    %2 = vector.load %arg3[%c0_1, %c0_2] : memref<256x1xf32, #tpu.memory_space<vmem>>, vector<256x1xf32>
    %c0_3 = arith.constant 0 : index
    %c0_4 = arith.constant 0 : index
    %3 = vector.load %arg2[%c0_3, %c0_4] : memref<256x16xbf16, #tpu.memory_space<vmem>>, vector<256x16xbf16>
    %cst = arith.constant dense<0.000000e+00> : vector<256x16xf32>
    %4 = tpu.matmul %1, %3, %cst {dimension_numbers = #tpu.dot_dimension_numbers<[1], [0], [0], [1], [0, 0, 1, 1], [], []>} : vector<256x256xbf16>, vector<256x16xbf16>, vector<256x16xf32> -> vector<256x16xf32>
    %5 = vector.broadcast %2 : vector<256x1xf32> to vector<256x16xf32>
    %6 = arith.mulf %5, %4 : vector<256x16xf32>
    %7 = arith.truncf %6 : vector<256x16xf32> to vector<256x16xbf16>
    %c0_5 = arith.constant 0 : index
    %c0_6 = arith.constant 0 : index
    %8 = vector.load %arg4[%c0_5, %c0_6] : memref<16x32xbf16, #tpu.memory_space<vmem>>, vector<16x32xbf16>
    %cst_7 = arith.constant dense<0.000000e+00> : vector<256x32xf32>
    %9 = tpu.matmul %7, %8, %cst_7 {dimension_numbers = #tpu.dot_dimension_numbers<[1], [0], [0], [1], [0, 0, 1, 1], [], []>} : vector<256x16xbf16>, vector<16x32xbf16>, vector<256x32xf32> -> vector<256x32xf32>
    %c0_8 = arith.constant 0 : index
    %c0_9 = arith.constant 0 : index
    %10 = vector.load %arg5[%c0_8, %c0_9] : memref<1x32xf32, #tpu.memory_space<vmem>>, vector<1x32xf32>
    %11 = vector.broadcast %10 : vector<1x32xf32> to vector<256x32xf32>
    %12 = arith.addf %9, %11 : vector<256x32xf32>
    %cst_10 = arith.constant 0.000000e+00 : f32
    %13 = vector.broadcast %cst_10 : f32 to vector<256x32xf32>
    %14 = arith.maximumf %12, %13 : vector<256x32xf32>
    %15 = arith.truncf %14 : vector<256x32xf32> to vector<256x32xbf16>
    %c0_11 = arith.constant 0 : index
    %c0_12 = arith.constant 0 : index
    %16 = vector.load %arg6[%c0_11, %c0_12] : memref<32x128xbf16, #tpu.memory_space<vmem>>, vector<32x128xbf16>
    %cst_13 = arith.constant dense<0.000000e+00> : vector<256x128xf32>
    %17 = tpu.matmul %15, %16, %cst_13 {dimension_numbers = #tpu.dot_dimension_numbers<[1], [0], [0], [1], [0, 0, 1, 1], [], []>} : vector<256x32xbf16>, vector<32x128xbf16>, vector<256x128xf32> -> vector<256x128xf32>
    %18 = vector.broadcast %2 : vector<256x1xf32> to vector<256x128xf32>
    %19 = arith.mulf %18, %17 : vector<256x128xf32>
    %20 = arith.truncf %19 : vector<256x128xf32> to vector<256x128xbf16>
    %cst_14 = arith.constant dense<0.000000e+00> : vector<256x128xf32>
    %21 = tpu.matmul %1, %20, %cst_14 {dimension_numbers = #tpu.dot_dimension_numbers<[1], [0], [0], [1], [0, 0, 1, 1], [], []>} : vector<256x256xbf16>, vector<256x128xbf16>, vector<256x128xf32> -> vector<256x128xf32>
    %22 = vector.broadcast %2 : vector<256x1xf32> to vector<256x128xf32>
    %23 = arith.mulf %22, %21 : vector<256x128xf32>
    %c0_15 = arith.constant 0 : index
    %c0_16 = arith.constant 0 : index
    %24 = vector.load %arg7[%c0_15, %c0_16] : memref<1x128xf32, #tpu.memory_space<vmem>>, vector<1x128xf32>
    %25 = vector.broadcast %24 : vector<1x128xf32> to vector<256x128xf32>
    %26 = arith.addf %23, %25 : vector<256x128xf32>
    %27 = tpu.iota {dimensions = array<i32: 1>} : vector<256x128xi32>
    %c8_i32 = arith.constant 8 : i32
    %28 = vector.broadcast %c8_i32 : i32 to vector<256x128xi32>
    %29 = arith.cmpi slt, %27, %28 : vector<256x128xi32>
    %cst_17 = arith.constant -1.000000e+30 : f32
    %30 = vector.broadcast %cst_17 : f32 to vector<256x128xf32>
    %31 = arith.select %29, %26, %30 : vector<256x128xi1>, vector<256x128xf32>
    %cst_18 = arith.constant dense<0xFF800000> : vector<256xf32>
    %32 = vector.multi_reduction <maximumf>, %31, %cst_18 [1] : vector<256x128xf32> to vector<256xf32>
    %33 = vector.shape_cast %32 : vector<256xf32> to vector<256x1xf32>
    %34 = vector.broadcast %33 : vector<256x1xf32> to vector<256x128xf32>
    %35 = arith.subf %31, %34 : vector<256x128xf32>
    %36 = math.exp %35 : vector<256x128xf32>
    %cst_19 = arith.constant 0.000000e+00 : f32
    %37 = vector.broadcast %cst_19 : f32 to vector<256x128xf32>
    %38 = arith.select %29, %36, %37 : vector<256x128xi1>, vector<256x128xf32>
    %cst_20 = arith.constant dense<0.000000e+00> : vector<256xf32>
    %39 = vector.multi_reduction <add>, %38, %cst_20 [1] : vector<256x128xf32> to vector<256xf32>
    %40 = vector.shape_cast %39 : vector<256xf32> to vector<256x1xf32>
    %41 = math.log %40 : vector<256x1xf32>
    %42 = vector.broadcast %33 : vector<256x1xf32> to vector<256x128xf32>
    %43 = arith.subf %31, %42 : vector<256x128xf32>
    %44 = vector.broadcast %41 : vector<256x1xf32> to vector<256x128xf32>
    %45 = arith.subf %43, %44 : vector<256x128xf32>
    %cst_21 = arith.constant 0.000000e+00 : f32
    %46 = vector.broadcast %cst_21 : f32 to vector<256x128xf32>
    %47 = arith.select %29, %45, %46 : vector<256x128xi1>, vector<256x128xf32>
    %c0_22 = arith.constant 0 : index
    %c0_23 = arith.constant 0 : index
    %48 = vector.load %arg8[%c0_22, %c0_23] : memref<256x128xf32, #tpu.memory_space<vmem>>, vector<256x128xf32>
    tpu.vector_store %arg8[%c0_22, %c0_23], %47 {strides = array<i32>} : memref<256x128xf32, #tpu.memory_space<vmem>>, vector<256x128xf32>,
    return
  }
  func.func @transform_0(%arg0: i32) -> (i32, i32) {
    %c0_i32 = arith.constant 0 : i32
    %c0_i32_0 = arith.constant 0 : i32
    %c0_i32_1 = arith.constant 0 : i32
    return %c0_i32, %c0_i32_0 : i32, i32
  }
  func.func @transform_1(%arg0: i32) -> (i32, i32) {
    %c0_i32 = arith.constant 0 : i32
    %c0_i32_0 = arith.constant 0 : i32
    %c0_i32_1 = arith.constant 0 : i32
    return %c0_i32, %c0_i32_0 : i32, i32
  }
  func.func @transform_2(%arg0: i32) -> (i32, i32) {
    %c0_i32 = arith.constant 0 : i32
    %c0_i32_0 = arith.constant 0 : i32
    %c0_i32_1 = arith.constant 0 : i32
    return %c0_i32, %c0_i32_0 : i32, i32
  }
  func.func @transform_3(%arg0: i32) -> (i32, i32) {
    %c0_i32 = arith.constant 0 : i32
    %c0_i32_0 = arith.constant 0 : i32
    %c0_i32_1 = arith.constant 0 : i32
    return %c0_i32, %c0_i32_0 : i32, i32
  }
  func.func @transform_4(%arg0: i32) -> (i32, i32) {
    %c0_i32 = arith.constant 0 : i32
    %c0_i32_0 = arith.constant 0 : i32
    %c0_i32_1 = arith.constant 0 : i32
    return %c0_i32, %c0_i32_0 : i32, i32
  }
  func.func @transform_5(%arg0: i32) -> (i32, i32) {
    %c0_i32 = arith.constant 0 : i32
    %c0_i32_0 = arith.constant 0 : i32
    %c0_i32_1 = arith.constant 0 : i32
    return %c0_i32, %c0_i32_0 : i32, i32
  }
  func.func @transform_6(%arg0: i32) -> (i32, i32) {
    %c0_i32 = arith.constant 0 : i32
    %c0_i32_0 = arith.constant 0 : i32
    %c0_i32_1 = arith.constant 0 : i32
    return %c0_i32, %c0_i32_0 : i32, i32
  }
  func.func @transform_7(%arg0: i32) -> (i32, i32) {
    %c0_i32 = arith.constant 0 : i32
    %c0_i32_0 = arith.constant 0 : i32
    %c0_i32_1 = arith.constant 0 : i32
    return %c0_i32, %c0_i32_0 : i32, i32
  }
}

</mosaic_0001>

<llo_original>
// kernel: tpu_custom_call.1
$region0: #{tpu_custom_call.1}
  #allocation0 [shape = 'u32[]', space=smem, size = 0x4, offset = 0x4, fixed_abs, tag = 'smem constant byte address 0x4 - core index']
  #allocation1 [shape = 'u32[144,128]{1,0:T(1,128)}', space=vmem, size = 0x12000, scoped, tag = 'internal scratch']
  %s0 = inlined_call_operand.vmem [shape: s8[256,256], index: 0, kind: input, shape index: {}]
  %s1 = inlined_call_operand.vmem [shape: bf16[256,16], index: 1, kind: input, shape index: {}]
  %s2 = inlined_call_operand.vmem [shape: f32[256,1], index: 2, kind: input, shape index: {}]
  %s3 = inlined_call_operand.vmem [shape: bf16[16,32], index: 3, kind: input, shape index: {}]
  %s4 = inlined_call_operand.vmem [shape: f32[1,32], index: 4, kind: input, shape index: {}]
  %s5 = inlined_call_operand.vmem [shape: bf16[32,128], index: 5, kind: input, shape index: {}]
  %s6 = inlined_call_operand.vmem [shape: f32[1,128], index: 6, kind: input, shape index: {}]
  %s7 = inlined_call_operand.hbm [shape: f32[256,128], index: 7, kind: output, shape index: {}]
  %s8 = sld [smem:[#allocation0]]
  $region38: #{tpu_custom_call.1} parent=0
    _
  %s10 = ssub.s32 1, %s8
  %s11 = scalar_select 0, %s10, %s8
  $region1: #{tpu_custom_call.1} parent=0
    #allocation2 [shape = 'u8[131072]{0}', space=vmem, size = 0x20000, scoped, tag = 'output window, operand 0, single buffered']
    #allocation3 [shape = 's32[1]{0}', space=sflag, size = 0x4, scoped, tag = 'scoped memory for tpu_custom_call.1']
    %12 = vsyncpa [#allocation3], 0
    // Predicated region
    $region2: #{tpu_custom_call.1} parent=1 // pred_check
      _
    $region3: #{tpu_custom_call.1} parent=1 // pred_check_branch
      %14 = sbr.rel (0) target = $region5
    $region4: #{tpu_custom_call.1} parent=1 // pred_region
      _
    $region5: #{tpu_custom_call.1} parent=1 // pred_fallthru
      _
    // Predicated region
    $region6: #{tpu_custom_call.1} parent=1 // pred_check
      _
    $region7: #{tpu_custom_call.1} parent=1 // pred_check_branch
      %16 = sbr.rel (0) target = $region9
    $region8: #{tpu_custom_call.1} parent=1 // pred_region
      _
    $region9: #{tpu_custom_call.1} parent=1 // pred_fallthru
      _
    // Predicated region
    $region10: #{tpu_custom_call.1} parent=1 // pred_check
      _
    $region11: #{tpu_custom_call.1} parent=1 // pred_check_branch
      %18 = sbr.rel (0) target = $region13
    $region12: #{tpu_custom_call.1} parent=1 // pred_region
      _
    $region13: #{tpu_custom_call.1} parent=1 // pred_fallthru
      _
    // Predicated region
    $region14: #{tpu_custom_call.1} parent=1 // pred_check
      _
    $region15: #{tpu_custom_call.1} parent=1 // pred_check_branch
      %20 = sbr.rel (0) target = $region17
    $region16: #{tpu_custom_call.1} parent=1 // pred_region
      _
    $region17: #{tpu_custom_call.1} parent=1 // pred_fallthru
      _
    // Predicated region
    $region18: #{tpu_custom_call.1} parent=1 // pred_check
      _
    $region19: #{tpu_custom_call.1} parent=1 // pred_check_branch
      %22 = sbr.rel (0) target = $region21
    $region20: #{tpu_custom_call.1} parent=1 // pred_region
      _
    $region21: #{tpu_custom_call.1} parent=1 // pred_fallthru
      _
    // Predicated region
    $region22: #{tpu_custom_call.1} parent=1 // pred_check
      _
    $region23: #{tpu_custom_call.1} parent=1 // pred_check_branch
      %24 = sbr.rel (0) target = $region25
    $region24: #{tpu_custom_call.1} parent=1 // pred_region
      _
    $region25: #{tpu_custom_call.1} parent=1 // pred_fallthru
      _
    // Predicated region
    $region26: #{tpu_custom_call.1} parent=1 // pred_check
      _
    $region27: #{tpu_custom_call.1} parent=1 // pred_check_branch
      %26 = sbr.rel (0) target = $region29
    $region28: #{tpu_custom_call.1} parent=1 // pred_region
      _
    $region29: #{tpu_custom_call.1} parent=1 // pred_fallthru
      _
    %v28 = vld [vmem:[%s0] sm:$0xff]
    %v29 = vld [vmem:[%s0 + $0x8] sm:$0xff]
    %v30 = vld [vmem:[%s0 + $0x10] sm:$0xff]
    %v31 = vld [vmem:[%s0 + $0x18] sm:$0xff]
    %v32 = vld [vmem:[%s0 + $0x20] sm:$0xff]
    %v33 = vld [vmem:[%s0 + $0x28] sm:$0xff]
    %v34 = vld [vmem:[%s0 + $0x30] sm:$0xff]
    %v35 = vld [vmem:[%s0 + $0x38] sm:$0xff]
    %v36 = vld [vmem:[%s0 + $0x40] sm:$0xff]
    %v37 = vld [vmem:[%s0 + $0x48] sm:$0xff]
    %v38 = vld [vmem:[%s0 + $0x50] sm:$0xff]
    %v39 = vld [vmem:[%s0 + $0x58] sm:$0xff]
    %v40 = vld [vmem:[%s0 + $0x60] sm:$0xff]
    %v41 = vld [vmem:[%s0 + $0x68] sm:$0xff]
    %v42 = vld [vmem:[%s0 + $0x70] sm:$0xff]
    %v43 = vld [vmem:[%s0 + $0x78] sm:$0xff]
    %v44 = vunpack.c.l.s8.bf16 %v28
    %v45 = vunpack.c.l.s8.bf16 %v29
    %v46 = vunpack.c.h.s8.bf16 %v28
    %v47 = vunpack.c.h.s8.bf16 %v29
    %v48 = vunpack.c.l.s8.bf16 %v30
    %v49 = vunpack.c.l.s8.bf16 %v31
    %v50 = vunpack.c.h.s8.bf16 %v30
    %v51 = vunpack.c.h.s8.bf16 %v31
    %v52 = vunpack.c.l.s8.bf16 %v32
    %v53 = vunpack.c.l.s8.bf16 %v33
    %v54 = vunpack.c.h.s8.bf16 %v32
    %v55 = vunpack.c.h.s8.bf16 %v33
    %v56 = vunpack.c.l.s8.bf16 %v34
    %v57 = vunpack.c.l.s8.bf16 %v35
    %v58 = vunpack.c.h.s8.bf16 %v34
    %v59 = vunpack.c.h.s8.bf16 %v35
    %v60 = vunpack.c.l.s8.bf16 %v36
    %v61 = vunpack.c.l.s8.bf16 %v37
    %v62 = vunpack.c.h.s8.bf16 %v36
    %v63 = vunpack.c.h.s8.bf16 %v37
    %v64 = vunpack.c.l.s8.bf16 %v38
    %v65 = vunpack.c.l.s8.bf16 %v39
    %v66 = vunpack.c.h.s8.bf16 %v38
    %v67 = vunpack.c.h.s8.bf16 %v39
    %v68 = vunpack.c.l.s8.bf16 %v40
    %v69 = vunpack.c.l.s8.bf16 %v41
    %v70 = vunpack.c.h.s8.bf16 %v40
    %v71 = vunpack.c.h.s8.bf16 %v41
    %v72 = vunpack.c.l.s8.bf16 %v42
    %v73 = vunpack.c.l.s8.bf16 %v43
    %v74 = vunpack.c.h.s8.bf16 %v42
    %v75 = vunpack.c.h.s8.bf16 %v43
    %v76 = vld [vmem:[%s2] sm:$0xff]
    %v77 = vld [vmem:[%s2 + $0x8] sm:$0xff]
    %v78 = vld [vmem:[%s2 + $0x10] sm:$0xff]
    %v79 = vld [vmem:[%s2 + $0x18] sm:$0xff]
    %v80 = vld [vmem:[%s2 + $0x20] sm:$0xff]
    %v81 = vld [vmem:[%s2 + $0x28] sm:$0xff]
    %v82 = vld [vmem:[%s2 + $0x30] sm:$0xff]
    %v83 = vld [vmem:[%s2 + $0x38] sm:$0xff]
    %v84 = vld [vmem:[%s2 + $0x40] sm:$0xff]
    %v85 = vld [vmem:[%s2 + $0x48] sm:$0xff]
    %v86 = vld [vmem:[%s2 + $0x50] sm:$0xff]
    %v87 = vld [vmem:[%s2 + $0x58] sm:$0xff]
    %v88 = vld [vmem:[%s2 + $0x60] sm:$0xff]
    %v89 = vld [vmem:[%s2 + $0x68] sm:$0xff]
    %v90 = vld [vmem:[%s2 + $0x70] sm:$0xff]
    %v91 = vld [vmem:[%s2 + $0x78] sm:$0xff]
    %v92 = vld [vmem:[%s2 + $0x80] sm:$0xff]
    %v93 = vld [vmem:[%s2 + $0x88] sm:$0xff]
    %v94 = vld [vmem:[%s2 + $0x90] sm:$0xff]
    %v95 = vld [vmem:[%s2 + $0x98] sm:$0xff]
    %v96 = vld [vmem:[%s2 + $0xa0] sm:$0xff]
    %v97 = vld [vmem:[%s2 + $0xa8] sm:$0xff]
    %v98 = vld [vmem:[%s2 + $0xb0] sm:$0xff]
    %v99 = vld [vmem:[%s2 + $0xb8] sm:$0xff]
    %v100 = vld [vmem:[%s2 + $0xc0] sm:$0xff]
    %v101 = vld [vmem:[%s2 + $0xc8] sm:$0xff]
    %v102 = vld [vmem:[%s2 + $0xd0] sm:$0xff]
    %v103 = vld [vmem:[%s2 + $0xd8] sm:$0xff]
    %v104 = vld [vmem:[%s2 + $0xe0] sm:$0xff]
    %v105 = vld [vmem:[%s2 + $0xe8] sm:$0xff]
    %v106 = vld [vmem:[%s2 + $0xf0] sm:$0xff]
    %v107 = vld [vmem:[%s2 + $0xf8] sm:$0xff]
    %v108 = vld [vmem:[%s1] sm:$0xf]
    %v109 = vld [vmem:[%s1 + $0x4] sm:$0xf]
    %v110 = vld [vmem:[%s1 + $0x8] sm:$0xf]
    %v111 = vld [vmem:[%s1 + $0xc] sm:$0xf]
    %v112 = vld [vmem:[%s1 + $0x10] sm:$0xf]
    %v113 = vld [vmem:[%s1 + $0x14] sm:$0xf]
    %v114 = vld [vmem:[%s1 + $0x18] sm:$0xf]
    %v115 = vld [vmem:[%s1 + $0x1c] sm:$0xf]
    %v116 = vld [vmem:[%s1 + $0x20] sm:$0xf]
    %v117 = vld [vmem:[%s1 + $0x24] sm:$0xf]
    %v118 = vld [vmem:[%s1 + $0x28] sm:$0xf]
    %v119 = vld [vmem:[%s1 + $0x2c] sm:$0xf]
    %v120 = vld [vmem:[%s1 + $0x30] sm:$0xf]
    %v121 = vld [vmem:[%s1 + $0x34] sm:$0xf]
    %v122 = vld [vmem:[%s1 + $0x38] sm:$0xf]
    %v123 = vld [vmem:[%s1 + $0x3c] sm:$0xf]
    %v124 = vld [vmem:[%s1 + $0x40] sm:$0xf]
    %v125 = vld [vmem:[%s1 + $0x44] sm:$0xf]
    %v126 = vld [vmem:[%s1 + $0x48] sm:$0xf]
    %v127 = vld [vmem:[%s1 + $0x4c] sm:$0xf]
    %v128 = vld [vmem:[%s1 + $0x50] sm:$0xf]
    %v129 = vld [vmem:[%s1 + $0x54] sm:$0xf]
    %v130 = vld [vmem:[%s1 + $0x58] sm:$0xf]
    %v131 = vld [vmem:[%s1 + $0x5c] sm:$0xf]
    %v132 = vld [vmem:[%s1 + $0x60] sm:$0xf]
    %v133 = vld [vmem:[%s1 + $0x64] sm:$0xf]
    %v134 = vld [vmem:[%s1 + $0x68] sm:$0xf]
    %v135 = vld [vmem:[%s1 + $0x6c] sm:$0xf]
    %v136 = vld [vmem:[%s1 + $0x70] sm:$0xf]
    %v137 = vld [vmem:[%s1 + $0x74] sm:$0xf]
    %v138 = vld [vmem:[%s1 + $0x78] sm:$0xf]
    %v139 = vld [vmem:[%s1 + $0x7c] sm:$0xf]
    %v172 = vunpack.c.l.b16 %v108
    %v173 = vunpack.c.l.b16 %v109
    %v174 = vunpack.c.l.b16 %v110
    %v175 = vunpack.c.l.b16 %v111
    %v176 = vunpack.c.l.b16 %v112
    %v177 = vunpack.c.l.b16 %v113
    %v178 = vunpack.c.l.b16 %v114
    %v179 = vunpack.c.l.b16 %v115
    %v180 = vunpack.c.l.b16 %v116
    %v181 = vunpack.c.l.b16 %v117
    %v182 = vunpack.c.l.b16 %v118
    %v183 = vunpack.c.l.b16 %v119
    %v184 = vunpack.c.l.b16 %v120
    %v185 = vunpack.c.l.b16 %v121
    %v186 = vunpack.c.l.b16 %v122
    %v187 = vunpack.c.l.b16 %v123
    %v188 = vunpack.c.l.b16 %v124
    %v189 = vunpack.c.l.b16 %v125
    %v190 = vunpack.c.l.b16 %v126
    %v191 = vunpack.c.l.b16 %v127
    %v192 = vunpack.c.l.b16 %v128
    %v193 = vunpack.c.l.b16 %v129
    %v194 = vunpack.c.l.b16 %v130
    %v195 = vunpack.c.l.b16 %v131
    %v196 = vunpack.c.l.b16 %v132
    %v197 = vunpack.c.l.b16 %v133
    %v198 = vunpack.c.l.b16 %v134
    %v199 = vunpack.c.l.b16 %v135
    %v200 = vunpack.c.l.b16 %v136
    %v201 = vunpack.c.l.b16 %v137
    %v202 = vunpack.c.l.b16 %v138
    %v203 = vunpack.c.l.b16 %v139
    %v204 = vpack.c.b16 %v173, %v172
    %v205 = vpack.c.b16 %v175, %v174
    %v206 = vpack.c.b16 %v177, %v176
    %v207 = vpack.c.b16 %v179, %v178
    %v208 = vpack.c.b16 %v181, %v180
    %v209 = vpack.c.b16 %v183, %v182
    %v210 = vpack.c.b16 %v185, %v184
    %v211 = vpack.c.b16 %v187, %v186
    %v212 = vpack.c.b16 %v189, %v188
    %v213 = vpack.c.b16 %v191, %v190
    %v214 = vpack.c.b16 %v193, %v192
    %v215 = vpack.c.b16 %v195, %v194
    %v216 = vpack.c.b16 %v197, %v196
    %v217 = vpack.c.b16 %v199, %v198
    %v218 = vpack.c.b16 %v201, %v200
    %v219 = vpack.c.b16 %v203, %v202
    %236 = vmatprep.subr.bf16.mxu0 0
    %237 = vmatpush1.bf16.msra.mxu0 %v204
    %238 = vmatprep.subr.bf16.mxu0 0
    %239 = vmatpush1.bf16.msra.mxu0 %v205
    %240 = vmatprep.subr.bf16.mxu0 0
    %241 = vmatpush1.bf16.msra.mxu0 %v206
    %242 = vmatprep.subr.bf16.mxu0 0
    %243 = vmatpush1.bf16.msra.mxu0 %v207
    %244 = vmatprep.subr.bf16.mxu0 0
    %245 = vmatpush1.bf16.msra.mxu0 %v208
    %246 = vmatprep.subr.bf16.mxu0 0
    %247 = vmatpush1.bf16.msra.mxu0 %v209
    %248 = vmatprep.subr.bf16.mxu0 0
    %249 = vmatpush1.bf16.msra.mxu0 %v210
    %250 = vmatprep.subr.bf16.mxu0 0
    %251 = vmatpush1.bf16.msra.mxu0 %v211
    %252 = vmatprep.subr.bf16.mxu0 0
    %253 = vmatpush1.bf16.msra.mxu0 %v212
    %254 = vmatprep.subr.bf16.mxu0 0
    %255 = vmatpush1.bf16.msra.mxu0 %v213
    %256 = vmatprep.subr.bf16.mxu0 0
    %257 = vmatpush1.bf16.msra.mxu0 %v214
    %258 = vmatprep.subr.bf16.mxu0 0
    %259 = vmatpush1.bf16.msra.mxu0 %v215
    %260 = vmatprep.subr.bf16.mxu0 0
    %261 = vmatpush1.bf16.msra.mxu0 %v216
    %262 = vmatprep.subr.bf16.mxu0 0
    %263 = vmatpush1.bf16.msra.mxu0 %v217
    %264 = vmatprep.subr.bf16.mxu0 0
    %265 = vmatpush1.bf16.msra.mxu0 %v218
    %266 = vmatprep.subr.bf16.mxu0 0
    %267 = vmatpush1.bf16.msra.mxu0 %v219
    %268 = vmatprep.mubr.bf16.mxu0 %v45
    %269 = vmatmul.mubr.bf16.gmra.mrb[0].mxu0 %v44
    %v270 = vpop.f32.mrb[0].mxu0
    %v271 = vadd.f32 0.0, %v270
    %v272 = vpop.f32.mrb[0].mxu0
    %v273 = vpop.f32.mrb[0].mxu0
    %v274 = vadd.f32 0.0, %v273
    %v275 = vpop.f32.mrb[0].mxu0
    %276 = vmatprep.mubr.bf16.mxu0 %v47
    %277 = vmatmul.mubr.bf16.gmra.mrb[0].mxu0 %v46
    %v278 = vpop.f32.mrb[0].mxu0
    %v279 = vadd.f32 0.0, %v278
    %v280 = vpop.f32.mrb[0].mxu0
    %v281 = vpop.f32.mrb[0].mxu0
    %v282 = vadd.f32 0.0, %v281
    %v283 = vpop.f32.mrb[0].mxu0
    %284 = vmatprep.mubr.bf16.mxu0 %v49
    %285 = vmatmul.mubr.bf16.gmra.mrb[0].mxu0 %v48
    %v286 = vpop.f32.mrb[0].mxu0
    %v287 = vadd.f32 0.0, %v286
    %v288 = vpop.f32.mrb[0].mxu0
    %v289 = vpop.f32.mrb[0].mxu0
    %v290 = vadd.f32 0.0, %v289
    %v291 = vpop.f32.mrb[0].mxu0
    %292 = vmatprep.mubr.bf16.mxu0 %v51
    %293 = vmatmul.mubr.bf16.gmra.mrb[0].mxu0 %v50
    %v294 = vpop.f32.mrb[0].mxu0
    %v295 = vadd.f32 0.0, %v294
    %v296 = vpop.f32.mrb[0].mxu0
    %v297 = vpop.f32.mrb[0].mxu0
    %v298 = vadd.f32 0.0, %v297
    %v299 = vpop.f32.mrb[0].mxu0
    %300 = vmatprep.mubr.bf16.mxu0 %v53
    %301 = vmatmul.mubr.bf16.gmra.mrb[0].mxu0 %v52
    %v302 = vpop.f32.mrb[0].mxu0
    %v303 = vadd.f32 0.0, %v302
    %v304 = vpop.f32.mrb[0].mxu0
    %v305 = vpop.f32.mrb[0].mxu0
    %v306 = vadd.f32 0.0, %v305
    %v307 = vpop.f32.mrb[0].mxu0
    %308 = vmatprep.mubr.bf16.mxu0 %v55
    %309 = vmatmul.mubr.bf16.gmra.mrb[0].mxu0 %v54
    %v310 = vpop.f32.mrb[0].mxu0
    %v311 = vadd.f32 0.0, %v310
    %v312 = vpop.f32.mrb[0].mxu0
    %v313 = vpop.f32.mrb[0].mxu0
    %v314 = vadd.f32 0.0, %v313
    %v315 = vpop.f32.mrb[0].mxu0
    %316 = vmatprep.mubr.bf16.mxu0 %v57
    %317 = vmatmul.mubr.bf16.gmra.mrb[0].mxu0 %v56
    %v318 = vpop.f32.mrb[0].mxu0
    %v319 = vadd.f32 0.0, %v318
    %v320 = vpop.f32.mrb[0].mxu0
    %v321 = vpop.f32.mrb[0].mxu0
    %v322 = vadd.f32 0.0, %v321
    %v323 = vpop.f32.mrb[0].mxu0
    %324 = vmatprep.mubr.bf16.mxu0 %v59
    %325 = vmatmul.mubr.bf16.gmra.mrb[0].mxu0 %v58
    %v326 = vpop.f32.mrb[0].mxu0
    %v327 = vadd.f32 0.0, %v326
    %v328 = vpop.f32.mrb[0].mxu0
    %v329 = vpop.f32.mrb[0].mxu0
    %v330 = vadd.f32 0.0, %v329
    %v331 = vpop.f32.mrb[0].mxu0
    %332 = vmatprep.mubr.bf16.mxu0 %v61
    %333 = vmatmul.mubr.bf16.gmra.mrb[0].mxu0 %v60
    %v334 = vpop.f32.mrb[0].mxu0
    %v335 = vadd.f32 0.0, %v334
    %v336 = vpop.f32.mrb[0].mxu0
    %v337 = vpop.f32.mrb[0].mxu0
    %v338 = vadd.f32 0.0, %v337
    %v339 = vpop.f32.mrb[0].mxu0
    %340 = vmatprep.mubr.bf16.mxu0 %v63
    %341 = vmatmul.mubr.bf16.gmra.mrb[0].mxu0 %v62
    %v342 = vpop.f32.mrb[0].mxu0
    %v343 = vadd.f32 0.0, %v342
    %v344 = vpop.f32.mrb[0].mxu0
    %v345 = vpop.f32.mrb[0].mxu0
    %v346 = vadd.f32 0.0, %v345
    %v347 = vpop.f32.mrb[0].mxu0
    %348 = vmatprep.mubr.bf16.mxu0 %v65
    %349 = vmatmul.mubr.bf16.gmra.mrb[0].mxu0 %v64
    %v350 = vpop.f32.mrb[0].mxu0
    %v351 = vadd.f32 0.0, %v350
    %v352 = vpop.f32.mrb[0].mxu0
    %v353 = vpop.f32.mrb[0].mxu0
    %v354 = vadd.f32 0.0, %v353
    %v355 = vpop.f32.mrb[0].mxu0
    %356 = vmatprep.mubr.bf16.mxu0 %v67
    %357 = vmatmul.mubr.bf16.gmra.mrb[0].mxu0 %v66
    %v358 = vpop.f32.mrb[0].mxu0
    %v359 = vadd.f32 0.0, %v358
    %v360 = vpop.f32.mrb[0].mxu0
    %v361 = vpop.f32.mrb[0].mxu0
    %v362 = vadd.f32 0.0, %v361
    %v363 = vpop.f32.mrb[0].mxu0
    %364 = vmatprep.mubr.bf16.mxu0 %v69
    %365 = vmatmul.mubr.bf16.gmra.mrb[0].mxu0 %v68
    %v366 = vpop.f32.mrb[0].mxu0
    %v367 = vadd.f32 0.0, %v366
    %v368 = vpop.f32.mrb[0].mxu0
    %v369 = vpop.f32.mrb[0].mxu0
    %v370 = vadd.f32 0.0, %v369
    %v371 = vpop.f32.mrb[0].mxu0
    %372 = vmatprep.mubr.bf16.mxu0 %v71
    %373 = vmatmul.mubr.bf16.gmra.mrb[0].mxu0 %v70
    %v374 = vpop.f32.mrb[0].mxu0
    %v375 = vadd.f32 0.0, %v374
    %v376 = vpop.f32.mrb[0].mxu0
    %v377 = vpop.f32.mrb[0].mxu0
    %v378 = vadd.f32 0.0, %v377
    %v379 = vpop.f32.mrb[0].mxu0
    %380 = vmatprep.mubr.bf16.mxu0 %v73
    %381 = vmatmul.mubr.bf16.gmra.mrb[0].mxu0 %v72
    %v382 = vpop.f32.mrb[0].mxu0
    %v383 = vadd.f32 0.0, %v382
    %v384 = vpop.f32.mrb[0].mxu0
    %v385 = vpop.f32.mrb[0].mxu0
    %v386 = vadd.f32 0.0, %v385
    %v387 = vpop.f32.mrb[0].mxu0
    %388 = vmatprep.mubr.bf16.mxu0 %v75
    %389 = vmatmul.mubr.bf16.gmra.mrb[0].mxu0 %v74
    %v390 = vpop.f32.mrb[0].mxu0
    %v391 = vadd.f32 0.0, %v390
    %v392 = vpop.f32.mrb[0].mxu0
    %v393 = vpop.f32.mrb[0].mxu0
    %v394 = vadd.f32 0.0, %v393
    %v395 = vpop.f32.mrb[0].mxu0
    %396 = vdwg.mxu0
    %398 = vset.pattern.permute.xlu0 0
    %399 = vperm.xlu0 %398, %v76
    %v400 = vpop.permute.xlu0 %399
    %403 = vset.pattern.permute.xlu0 0
    %404 = vperm.xlu0 %403, %v77
    %v405 = vpop.permute.xlu0 %404
    %408 = vset.pattern.permute.xlu0 0
    %409 = vperm.xlu0 %408, %v78
    %v410 = vpop.permute.xlu0 %409
    %413 = vset.pattern.permute.xlu0 0
    %414 = vperm.xlu0 %413, %v79
    %v415 = vpop.permute.xlu0 %414
    %418 = vset.pattern.permute.xlu0 0
    %419 = vperm.xlu0 %418, %v80
    %v420 = vpop.permute.xlu0 %419
    %423 = vset.pattern.permute.xlu0 0
    %424 = vperm.xlu0 %423, %v81
    %v425 = vpop.permute.xlu0 %424
    %428 = vset.pattern.permute.xlu0 0
    %429 = vperm.xlu0 %428, %v82
    %v430 = vpop.permute.xlu0 %429
    %433 = vset.pattern.permute.xlu0 0
    %434 = vperm.xlu0 %433, %v83
    %v435 = vpop.permute.xlu0 %434
    %438 = vset.pattern.permute.xlu0 0
    %439 = vperm.xlu0 %438, %v84
    %v440 = vpop.permute.xlu0 %439
    %443 = vset.pattern.permute.xlu0 0
    %444 = vperm.xlu0 %443, %v85
    %v445 = vpop.permute.xlu0 %444
    %448 = vset.pattern.permute.xlu0 0
    %449 = vperm.xlu0 %448, %v86
    %v450 = vpop.permute.xlu0 %449
    %453 = vset.pattern.permute.xlu0 0
    %454 = vperm.xlu0 %453, %v87
    %v455 = vpop.permute.xlu0 %454
    %458 = vset.pattern.permute.xlu0 0
    %459 = vperm.xlu0 %458, %v88
    %v460 = vpop.permute.xlu0 %459
    %463 = vset.pattern.permute.xlu0 0
    %464 = vperm.xlu0 %463, %v89
    %v465 = vpop.permute.xlu0 %464
    %468 = vset.pattern.permute.xlu0 0
    %469 = vperm.xlu0 %468, %v90
    %v470 = vpop.permute.xlu0 %469
    %473 = vset.pattern.permute.xlu0 0
    %474 = vperm.xlu0 %473, %v91
    %v475 = vpop.permute.xlu0 %474
    %478 = vset.pattern.permute.xlu0 0
    %479 = vperm.xlu0 %478, %v92
    %v480 = vpop.permute.xlu0 %479
    %483 = vset.pattern.permute.xlu0 0
    %484 = vperm.xlu0 %483, %v93
    %v485 = vpop.permute.xlu0 %484
    %488 = vset.pattern.permute.xlu0 0
    %489 = vperm.xlu0 %488, %v94
    %v490 = vpop.permute.xlu0 %489
    %493 = vset.pattern.permute.xlu0 0
    %494 = vperm.xlu0 %493, %v95
    %v495 = vpop.permute.xlu0 %494
    %498 = vset.pattern.permute.xlu0 0
    %499 = vperm.xlu0 %498, %v96
    %v500 = vpop.permute.xlu0 %499
    %503 = vset.pattern.permute.xlu0 0
    %504 = vperm.xlu0 %503, %v97
    %v505 = vpop.permute.xlu0 %504
    %508 = vset.pattern.permute.xlu0 0
    %509 = vperm.xlu0 %508, %v98
    %v510 = vpop.permute.xlu0 %509
    %513 = vset.pattern.permute.xlu0 0
    %514 = vperm.xlu0 %513, %v99
    %v515 = vpop.permute.xlu0 %514
    %518 = vset.pattern.permute.xlu0 0
    %519 = vperm.xlu0 %518, %v100
    %v520 = vpop.permute.xlu0 %519
    %523 = vset.pattern.permute.xlu0 0
    %524 = vperm.xlu0 %523, %v101
    %v525 = vpop.permute.xlu0 %524
    %528 = vset.pattern.permute.xlu0 0
    %529 = vperm.xlu0 %528, %v102
    %v530 = vpop.permute.xlu0 %529
    %533 = vset.pattern.permute.xlu0 0
    %534 = vperm.xlu0 %533, %v103
    %v535 = vpop.permute.xlu0 %534
    %538 = vset.pattern.permute.xlu0 0
    %539 = vperm.xlu0 %538, %v104
    %v540 = vpop.permute.xlu0 %539
    %543 = vset.pattern.permute.xlu0 0
    %544 = vperm.xlu0 %543, %v105
    %v545 = vpop.permute.xlu0 %544
    %548 = vset.pattern.permute.xlu0 0
    %549 = vperm.xlu0 %548, %v106
    %v550 = vpop.permute.xlu0 %549
    %553 = vset.pattern.permute.xlu0 0
    %554 = vperm.xlu0 %553, %v107
    %v555 = vpop.permute.xlu0 %554
    %v557 = vmul.f32 %v400, %v271
    %v558 = vmul.f32 %v405, %v274
    %v559 = vmul.f32 %v410, %v279
    %v560 = vmul.f32 %v415, %v282
    %v561 = vmul.f32 %v420, %v287
    %v562 = vmul.f32 %v425, %v290
    %v563 = vmul.f32 %v430, %v295
    %v564 = vmul.f32 %v435, %v298
    %v565 = vmul.f32 %v440, %v303
    %v566 = vmul.f32 %v445, %v306
    %v567 = vmul.f32 %v450, %v311
    %v568 = vmul.f32 %v455, %v314
    %v569 = vmul.f32 %v460, %v319
    %v570 = vmul.f32 %v465, %v322
    %v571 = vmul.f32 %v470, %v327
    %v572 = vmul.f32 %v475, %v330
    %v573 = vmul.f32 %v480, %v335
    %v574 = vmul.f32 %v485, %v338
    %v575 = vmul.f32 %v490, %v343
    %v576 = vmul.f32 %v495, %v346
    %v577 = vmul.f32 %v500, %v351
    %v578 = vmul.f32 %v505, %v354
    %v579 = vmul.f32 %v510, %v359
    %v580 = vmul.f32 %v515, %v362
    %v581 = vmul.f32 %v520, %v367
    %v582 = vmul.f32 %v525, %v370
    %v583 = vmul.f32 %v530, %v375
    %v584 = vmul.f32 %v535, %v378
    %v585 = vmul.f32 %v540, %v383
    %v586 = vmul.f32 %v545, %v386
    %v587 = vmul.f32 %v550, %v391
    %v588 = vmul.f32 %v555, %v394
    %v589 = vpack.c.bf16 %v558, %v557
    %v590 = vpack.c.bf16 %v560, %v559
    %v591 = vpack.c.bf16 %v562, %v561
    %v592 = vpack.c.bf16 %v564, %v563
    %v593 = vpack.c.bf16 %v566, %v565
    %v594 = vpack.c.bf16 %v568, %v567
    %v595 = vpack.c.bf16 %v570, %v569
    %v596 = vpack.c.bf16 %v572, %v571
    %v597 = vpack.c.bf16 %v574, %v573
    %v598 = vpack.c.bf16 %v576, %v575
    %v599 = vpack.c.bf16 %v578, %v577
    %v600 = vpack.c.bf16 %v580, %v579
    %v601 = vpack.c.bf16 %v582, %v581
    %v602 = vpack.c.bf16 %v584, %v583
    %v603 = vpack.c.bf16 %v586, %v585
    %v604 = vpack.c.bf16 %v588, %v587
    %v605 = vld [vmem:[%s3] sm:$0xf]
    %v606 = vld [vmem:[%s3 + $0x4] sm:$0xf]
    %v607 = vld [vmem:[%s4] sm:$0x1]
    %v609 = vlaneseq
    %v610 = vshrl.u32 %v609, 7
    %v611 = vsub.s32 0, %v610
    %v612 = vrot.slane %v607, %v611
    %v616 = vunpack.c.l.b16 %v605
    %v617 = vunpack.c.l.b16 %v606
    %v618 = vpack.c.b16 %v617, %v616
    %vm620 = vcmask 130048
    %v622 = vsel %vm620, %v589, 0
    %v625 = vsel %vm620, %v590, 0
    %v628 = vsel %vm620, %v591, 0
    %v631 = vsel %vm620, %v592, 0
    %v634 = vsel %vm620, %v593, 0
    %v637 = vsel %vm620, %v594, 0
    %v640 = vsel %vm620, %v595, 0
    %v643 = vsel %vm620, %v596, 0
    %v646 = vsel %vm620, %v597, 0
    %v649 = vsel %vm620, %v598, 0
    %v652 = vsel %vm620, %v599, 0
    %v655 = vsel %vm620, %v600, 0
    %v658 = vsel %vm620, %v601, 0
    %v661 = vsel %vm620, %v602, 0
    %v664 = vsel %vm620, %v603, 0
    %v667 = vsel %vm620, %v604, 0
    %669 = vmatprep.subr.bf16.mxu0 0
    %670 = vmatpush1.bf16.msra.mxu0 %v618
    %671 = vmatprep.subr.bf16.mxu0 0
    %672 = vmatpush1.bf16.msra.mxu0 0
    %673 = vmatprep.subr.bf16.mxu0 0
    %674 = vmatpush1.bf16.msra.mxu0 0
    %675 = vmatprep.subr.bf16.mxu0 0
    %676 = vmatpush1.bf16.msra.mxu0 0
    %677 = vmatprep.subr.bf16.mxu0 0
    %678 = vmatpush1.bf16.msra.mxu0 0
    %679 = vmatprep.subr.bf16.mxu0 0
    %680 = vmatpush1.bf16.msra.mxu0 0
    %681 = vmatprep.subr.bf16.mxu0 0
    %682 = vmatpush1.bf16.msra.mxu0 0
    %683 = vmatprep.subr.bf16.mxu0 0
    %684 = vmatpush1.bf16.msra.mxu0 0
    %685 = vmatprep.subr.bf16.mxu0 0
    %686 = vmatpush1.bf16.msra.mxu0 0
    %687 = vmatprep.subr.bf16.mxu0 0
    %688 = vmatpush1.bf16.msra.mxu0 0
    %689 = vmatprep.subr.bf16.mxu0 0
    %690 = vmatpush1.bf16.msra.mxu0 0
    %691 = vmatprep.subr.bf16.mxu0 0
    %692 = vmatpush1.bf16.msra.mxu0 0
    %693 = vmatprep.subr.bf16.mxu0 0
    %694 = vmatpush1.bf16.msra.mxu0 0
    %695 = vmatprep.subr.bf16.mxu0 0
    %696 = vmatpush1.bf16.msra.mxu0 0
    %697 = vmatprep.subr.bf16.mxu0 0
    %698 = vmatpush1.bf16.msra.mxu0 0
    %699 = vmatprep.subr.bf16.mxu0 0
    %700 = vmatpush1.bf16.msra.mxu0 0
    %701 = vmatprep.mubr.bf16.mxu0 0
    %702 = vmatmul.mubr.bf16.gmra.mrb[0].mxu0 %v622
    %v703 = vpop.f32.mrb[0].mxu0
    %v704 = vadd.f32 %v612, %v703
    %v705 = vpop.f32.mrb[0].mxu0
    %v706 = vpop.f32.mrb[0].mxu0
    %v707 = vadd.f32 %v612, %v706
    %v708 = vpop.f32.mrb[0].mxu0
    %709 = vmatprep.mubr.bf16.mxu0 0
    %710 = vmatmul.mubr.bf16.gmra.mrb[0].mxu0 %v625
    %v711 = vpop.f32.mrb[0].mxu0
    %v712 = vadd.f32 %v612, %v711
    %v713 = vpop.f32.mrb[0].mxu0
    %v714 = vpop.f32.mrb[0].mxu0
    %v715 = vadd.f32 %v612, %v714
    %v716 = vpop.f32.mrb[0].mxu0
    %717 = vmatprep.mubr.bf16.mxu0 0
    %718 = vmatmul.mubr.bf16.gmra.mrb[0].mxu0 %v628
    %v719 = vpop.f32.mrb[0].mxu0
    %v720 = vadd.f32 %v612, %v719
    %v721 = vpop.f32.mrb[0].mxu0
    %v722 = vpop.f32.mrb[0].mxu0
    %v723 = vadd.f32 %v612, %v722
    %v724 = vpop.f32.mrb[0].mxu0
    %725 = vmatprep.mubr.bf16.mxu0 0
    %726 = vmatmul.mubr.bf16.gmra.mrb[0].mxu0 %v631
    %v727 = vpop.f32.mrb[0].mxu0
    %v728 = vadd.f32 %v612, %v727
    %v729 = vpop.f32.mrb[0].mxu0
    %v730 = vpop.f32.mrb[0].mxu0
    %v731 = vadd.f32 %v612, %v730
    %v732 = vpop.f32.mrb[0].mxu0
    %733 = vmatprep.mubr.bf16.mxu0 0
    %734 = vmatmul.mubr.bf16.gmra.mrb[0].mxu0 %v634
    %v735 = vpop.f32.mrb[0].mxu0
    %v736 = vadd.f32 %v612, %v735
    %v737 = vpop.f32.mrb[0].mxu0
    %v738 = vpop.f32.mrb[0].mxu0
    %v739 = vadd.f32 %v612, %v738
    %v740 = vpop.f32.mrb[0].mxu0
    %741 = vmatprep.mubr.bf16.mxu0 0
    %742 = vmatmul.mubr.bf16.gmra.mrb[0].mxu0 %v637
    %v743 = vpop.f32.mrb[0].mxu0
    %v744 = vadd.f32 %v612, %v743
    %v745 = vpop.f32.mrb[0].mxu0
    %v746 = vpop.f32.mrb[0].mxu0
    %v747 = vadd.f32 %v612, %v746
    %v748 = vpop.f32.mrb[0].mxu0
    %749 = vmatprep.mubr.bf16.mxu0 0
    %750 = vmatmul.mubr.bf16.gmra.mrb[0].mxu0 %v640
    %v751 = vpop.f32.mrb[0].mxu0
    %v752 = vadd.f32 %v612, %v751
    %v753 = vpop.f32.mrb[0].mxu0
    %v754 = vpop.f32.mrb[0].mxu0
    %v755 = vadd.f32 %v612, %v754
    %v756 = vpop.f32.mrb[0].mxu0
    %757 = vmatprep.mubr.bf16.mxu0 0
    %758 = vmatmul.mubr.bf16.gmra.mrb[0].mxu0 %v643
    %v759 = vpop.f32.mrb[0].mxu0
    %v760 = vadd.f32 %v612, %v759
    %v761 = vpop.f32.mrb[0].mxu0
    %v762 = vpop.f32.mrb[0].mxu0
    %v763 = vadd.f32 %v612, %v762
    %v764 = vpop.f32.mrb[0].mxu0
    %765 = vmatprep.mubr.bf16.mxu0 0
    %766 = vmatmul.mubr.bf16.gmra.mrb[0].mxu0 %v646
    %v767 = vpop.f32.mrb[0].mxu0
    %v768 = vadd.f32 %v612, %v767
    %v769 = vpop.f32.mrb[0].mxu0
    %v770 = vpop.f32.mrb[0].mxu0
    %v771 = vadd.f32 %v612, %v770
    %v772 = vpop.f32.mrb[0].mxu0
    %773 = vmatprep.mubr.bf16.mxu0 0
    %774 = vmatmul.mubr.bf16.gmra.mrb[0].mxu0 %v649
    %v775 = vpop.f32.mrb[0].mxu0
    %v776 = vadd.f32 %v612, %v775
    %v777 = vpop.f32.mrb[0].mxu0
    %v778 = vpop.f32.mrb[0].mxu0
    %v779 = vadd.f32 %v612, %v778
    %v780 = vpop.f32.mrb[0].mxu0
    %781 = vmatprep.mubr.bf16.mxu0 0
    %782 = vmatmul.mubr.bf16.gmra.mrb[0].mxu0 %v652
    %v783 = vpop.f32.mrb[0].mxu0
    %v784 = vadd.f32 %v612, %v783
    %v785 = vpop.f32.mrb[0].mxu0
    %v786 = vpop.f32.mrb[0].mxu0
    %v787 = vadd.f32 %v612, %v786
    %v788 = vpop.f32.mrb[0].mxu0
    %789 = vmatprep.mubr.bf16.mxu0 0
    %790 = vmatmul.mubr.bf16.gmra.mrb[0].mxu0 %v655
    %v791 = vpop.f32.mrb[0].mxu0
    %v792 = vadd.f32 %v612, %v791
    %v793 = vpop.f32.mrb[0].mxu0
    %v794 = vpop.f32.mrb[0].mxu0
    %v795 = vadd.f32 %v612, %v794
    %v796 = vpop.f32.mrb[0].mxu0
    %797 = vmatprep.mubr.bf16.mxu0 0
    %798 = vmatmul.mubr.bf16.gmra.mrb[0].mxu0 %v658
    %v799 = vpop.f32.mrb[0].mxu0
    %v800 = vadd.f32 %v612, %v799
    %v801 = vpop.f32.mrb[0].mxu0
    %v802 = vpop.f32.mrb[0].mxu0
    %v803 = vadd.f32 %v612, %v802
    %v804 = vpop.f32.mrb[0].mxu0
    %805 = vmatprep.mubr.bf16.mxu0 0
    %806 = vmatmul.mubr.bf16.gmra.mrb[0].mxu0 %v661
    %v807 = vpop.f32.mrb[0].mxu0
    %v808 = vadd.f32 %v612, %v807
    %v809 = vpop.f32.mrb[0].mxu0
    %v810 = vpop.f32.mrb[0].mxu0
    %v811 = vadd.f32 %v612, %v810
    %v812 = vpop.f32.mrb[0].mxu0
    %813 = vmatprep.mubr.bf16.mxu0 0
    %814 = vmatmul.mubr.bf16.gmra.mrb[0].mxu0 %v664
    %v815 = vpop.f32.mrb[0].mxu0
    %v816 = vadd.f32 %v612, %v815
    %v817 = vpop.f32.mrb[0].mxu0
    %v818 = vpop.f32.mrb[0].mxu0
    %v819 = vadd.f32 %v612, %v818
    %v820 = vpop.f32.mrb[0].mxu0
    %821 = vmatprep.mubr.bf16.mxu0 0
    %822 = vmatmul.mubr.bf16.gmra.mrb[0].mxu0 %v667
    %v823 = vpop.f32.mrb[0].mxu0
    %v824 = vadd.f32 %v612, %v823
    %v825 = vpop.f32.mrb[0].mxu0
    %v826 = vpop.f32.mrb[0].mxu0
    %v827 = vadd.f32 %v612, %v826
    %v828 = vpop.f32.mrb[0].mxu0
    %829 = vdwg.mxu0
    %v830 = vmax.f32 %v704, 0.0
    %v831 = vmax.f32 %v707, 0.0
    %v832 = vmax.f32 %v712, 0.0
    %v833 = vmax.f32 %v715, 0.0
    %v834 = vmax.f32 %v720, 0.0
    %v835 = vmax.f32 %v723, 0.0
    %v836 = vmax.f32 %v728, 0.0
    %v837 = vmax.f32 %v731, 0.0
    %v838 = vmax.f32 %v736, 0.0
    %v839 = vmax.f32 %v739, 0.0
    %v840 = vmax.f32 %v744, 0.0
    %v841 = vmax.f32 %v747, 0.0
    %v842 = vmax.f32 %v752, 0.0
    %v843 = vmax.f32 %v755, 0.0
    %v844 = vmax.f32 %v760, 0.0
    %v845 = vmax.f32 %v763, 0.0
    %v846 = vmax.f32 %v768, 0.0
    %v847 = vmax.f32 %v771, 0.0
    %v848 = vmax.f32 %v776, 0.0
    %v849 = vmax.f32 %v779, 0.0
    %v850 = vmax.f32 %v784, 0.0
    %v851 = vmax.f32 %v787, 0.0
    %v852 = vmax.f32 %v792, 0.0
    %v853 = vmax.f32 %v795, 0.0
    %v854 = vmax.f32 %v800, 0.0
    %v855 = vmax.f32 %v803, 0.0
    %v856 = vmax.f32 %v808, 0.0
    %v857 = vmax.f32 %v811, 0.0
    %v858 = vmax.f32 %v816, 0.0
    %v859 = vmax.f32 %v819, 0.0
    %v860 = vmax.f32 %v824, 0.0
    %v861 = vmax.f32 %v827, 0.0
    %v862 = vpack.c.bf16 %v831, %v830
    %v863 = vpack.c.bf16 %v833, %v832
    %v864 = vpack.c.bf16 %v835, %v834
    %v865 = vpack.c.bf16 %v837, %v836
    %v866 = vpack.c.bf16 %v839, %v838
    %v867 = vpack.c.bf16 %v841, %v840
    %v868 = vpack.c.bf16 %v843, %v842
    %v869 = vpack.c.bf16 %v845, %v844
    %v870 = vpack.c.bf16 %v847, %v846
    %v871 = vpack.c.bf16 %v849, %v848
    %v872 = vpack.c.bf16 %v851, %v850
    %v873 = vpack.c.bf16 %v853, %v852
    %v874 = vpack.c.bf16 %v855, %v854
    %v875 = vpack.c.bf16 %v857, %v856
    %v876 = vpack.c.bf16 %v859, %v858
    %v877 = vpack.c.bf16 %v861, %v860
    %v878 = vld [vmem:[%s5] sm:$0xf]
    %v879 = vld [vmem:[%s5 + $0x4] sm:$0xf]
    %v880 = vld [vmem:[%s5 + $0x8] sm:$0xf]
    %v881 = vld [vmem:[%s5 + $0xc] sm:$0xf]
    %v886 = vunpack.c.l.b16 %v878
    %v887 = vunpack.c.l.b16 %v879
    %v888 = vunpack.c.l.b16 %v880
    %v889 = vunpack.c.l.b16 %v881
    %v890 = vpack.c.b16 %v887, %v886
    %v891 = vpack.c.b16 %v889, %v888
    %vm894 = vcmask 261120
    %v896 = vsel %vm894, %v862, 0
    %v899 = vsel %vm894, %v863, 0
    %v902 = vsel %vm894, %v864, 0
    %v905 = vsel %vm894, %v865, 0
    %v908 = vsel %vm894, %v866, 0
    %v911 = vsel %vm894, %v867, 0
    %v914 = vsel %vm894, %v868, 0
    %v917 = vsel %vm894, %v869, 0
    %v920 = vsel %vm894, %v870, 0
    %v923 = vsel %vm894, %v871, 0
    %v926 = vsel %vm894, %v872, 0
    %v929 = vsel %vm894, %v873, 0
    %v932 = vsel %vm894, %v874, 0
    %v935 = vsel %vm894, %v875, 0
    %v938 = vsel %vm894, %v876, 0
    %v941 = vsel %vm894, %v877, 0
    %943 = vmatprep.subr.bf16.mxu0 0
    %944 = vmatpush1.bf16.msra.mxu0 %v890
    %945 = vmatprep.subr.bf16.mxu0 0
    %946 = vmatpush1.bf16.msra.mxu0 %v891
    %947 = vmatprep.subr.bf16.mxu0 0
    %948 = vmatpush1.bf16.msra.mxu0 0
    %949 = vmatprep.subr.bf16.mxu0 0
    %950 = vmatpush1.bf16.msra.mxu0 0
    %951 = vmatprep.subr.bf16.mxu0 0
    %952 = vmatpush1.bf16.msra.mxu0 0
    %953 = vmatprep.subr.bf16.mxu0 0
    %954 = vmatpush1.bf16.msra.mxu0 0
    %955 = vmatprep.subr.bf16.mxu0 0
    %956 = vmatpush1.bf16.msra.mxu0 0
    %957 = vmatprep.subr.bf16.mxu0 0
    %958 = vmatpush1.bf16.msra.mxu0 0
    %959 = vmatprep.subr.bf16.mxu0 0
    %960 = vmatpush1.bf16.msra.mxu0 0
    %961 = vmatprep.subr.bf16.mxu0 0
    %962 = vmatpush1.bf16.msra.mxu0 0
    %963 = vmatprep.subr.bf16.mxu0 0
    %964 = vmatpush1.bf16.msra.mxu0 0
    %965 = vmatprep.subr.bf16.mxu0 0
    %966 = vmatpush1.bf16.msra.mxu0 0
    %967 = vmatprep.subr.bf16.mxu0 0
    %968 = vmatpush1.bf16.msra.mxu0 0
    %969 = vmatprep.subr.bf16.mxu0 0
    %970 = vmatpush1.bf16.msra.mxu0 0
    %971 = vmatprep.subr.bf16.mxu0 0
    %972 = vmatpush1.bf16.msra.mxu0 0
    %973 = vmatprep.subr.bf16.mxu0 0
    %974 = vmatpush1.bf16.msra.mxu0 0
    %975 = vmatprep.mubr.bf16.mxu0 0
    %976 = vmatmul.mubr.bf16.gmra.mrb[0].mxu0 %v896
    %v977 = vpop.f32.mrb[0].mxu0
    %v978 = vadd.f32 0.0, %v977
    %v979 = vpop.f32.mrb[0].mxu0
    %v980 = vpop.f32.mrb[0].mxu0
    %v981 = vadd.f32 0.0, %v980
    %v982 = vpop.f32.mrb[0].mxu0
    %983 = vmatprep.mubr.bf16.mxu0 0
    %984 = vmatmul.mubr.bf16.gmra.mrb[0].mxu0 %v899
    %v985 = vpop.f32.mrb[0].mxu0
    %v986 = vadd.f32 0.0, %v985
    %v987 = vpop.f32.mrb[0].mxu0
    %v988 = vpop.f32.mrb[0].mxu0
    %v989 = vadd.f32 0.0, %v988
    %v990 = vpop.f32.mrb[0].mxu0
    %991 = vmatprep.mubr.bf16.mxu0 0
    %992 = vmatmul.mubr.bf16.gmra.mrb[0].mxu0 %v902
    %v993 = vpop.f32.mrb[0].mxu0
    %v994 = vadd.f32 0.0, %v993
    %v995 = vpop.f32.mrb[0].mxu0
    %v996 = vpop.f32.mrb[0].mxu0
    %v997 = vadd.f32 0.0, %v996
    %v998 = vpop.f32.mrb[0].mxu0
    %999 = vmatprep.mubr.bf16.mxu0 0
    %1000 = vmatmul.mubr.bf16.gmra.mrb[0].mxu0 %v905
    %v1001 = vpop.f32.mrb[0].mxu0
    %v1002 = vadd.f32 0.0, %v1001
    %v1003 = vpop.f32.mrb[0].mxu0
    %v1004 = vpop.f32.mrb[0].mxu0
    %v1005 = vadd.f32 0.0, %v1004
    %v1006 = vpop.f32.mrb[0].mxu0
    %1007 = vmatprep.mubr.bf16.mxu0 0
    %1008 = vmatmul.mubr.bf16.gmra.mrb[0].mxu0 %v908
    %v1009 = vpop.f32.mrb[0].mxu0
    %v1010 = vadd.f32 0.0, %v1009
    %v1011 = vpop.f32.mrb[0].mxu0
    %v1012 = vpop.f32.mrb[0].mxu0
    %v1013 = vadd.f32 0.0, %v1012
    %v1014 = vpop.f32.mrb[0].mxu0
    %1015 = vmatprep.mubr.bf16.mxu0 0
    %1016 = vmatmul.mubr.bf16.gmra.mrb[0].mxu0 %v911
    %v1017 = vpop.f32.mrb[0].mxu0
    %v1018 = vadd.f32 0.0, %v1017
    %v1019 = vpop.f32.mrb[0].mxu0
    %v1020 = vpop.f32.mrb[0].mxu0
    %v1021 = vadd.f32 0.0, %v1020
    %v1022 = vpop.f32.mrb[0].mxu0
    %1023 = vmatprep.mubr.bf16.mxu0 0
    %1024 = vmatmul.mubr.bf16.gmra.mrb[0].mxu0 %v914
    %v1025 = vpop.f32.mrb[0].mxu0
    %v1026 = vadd.f32 0.0, %v1025
    %v1027 = vpop.f32.mrb[0].mxu0
    %v1028 = vpop.f32.mrb[0].mxu0
    %v1029 = vadd.f32 0.0, %v1028
    %v1030 = vpop.f32.mrb[0].mxu0
    %1031 = vmatprep.mubr.bf16.mxu0 0
    %1032 = vmatmul.mubr.bf16.gmra.mrb[0].mxu0 %v917
    %v1033 = vpop.f32.mrb[0].mxu0
    %v1034 = vadd.f32 0.0, %v1033
    %v1035 = vpop.f32.mrb[0].mxu0
    %v1036 = vpop.f32.mrb[0].mxu0
    %v1037 = vadd.f32 0.0, %v1036
    %v1038 = vpop.f32.mrb[0].mxu0
    %1039 = vmatprep.mubr.bf16.mxu0 0
    %1040 = vmatmul.mubr.bf16.gmra.mrb[0].mxu0 %v920
    %v1041 = vpop.f32.mrb[0].mxu0
    %v1042 = vadd.f32 0.0, %v1041
    %v1043 = vpop.f32.mrb[0].mxu0
    %v1044 = vpop.f32.mrb[0].mxu0
    %v1045 = vadd.f32 0.0, %v1044
    %v1046 = vpop.f32.mrb[0].mxu0
    %1047 = vmatprep.mubr.bf16.mxu0 0
    %1048 = vmatmul.mubr.bf16.gmra.mrb[0].mxu0 %v923
    %v1049 = vpop.f32.mrb[0].mxu0
    %v1050 = vadd.f32 0.0, %v1049
    %v1051 = vpop.f32.mrb[0].mxu0
    %v1052 = vpop.f32.mrb[0].mxu0
    %v1053 = vadd.f32 0.0, %v1052
    %v1054 = vpop.f32.mrb[0].mxu0
    %1055 = vmatprep.mubr.bf16.mxu0 0
    %1056 = vmatmul.mubr.bf16.gmra.mrb[0].mxu0 %v926
    %v1057 = vpop.f32.mrb[0].mxu0
    %v1058 = vadd.f32 0.0, %v1057
    %v1059 = vpop.f32.mrb[0].mxu0
    %v1060 = vpop.f32.mrb[0].mxu0
    %v1061 = vadd.f32 0.0, %v1060
    %v1062 = vpop.f32.mrb[0].mxu0
    %1063 = vmatprep.mubr.bf16.mxu0 0
    %1064 = vmatmul.mubr.bf16.gmra.mrb[0].mxu0 %v929
    %v1065 = vpop.f32.mrb[0].mxu0
    %v1066 = vadd.f32 0.0, %v1065
    %v1067 = vpop.f32.mrb[0].mxu0
    %v1068 = vpop.f32.mrb[0].mxu0
    %v1069 = vadd.f32 0.0, %v1068
    %v1070 = vpop.f32.mrb[0].mxu0
    %1071 = vmatprep.mubr.bf16.mxu0 0
    %1072 = vmatmul.mubr.bf16.gmra.mrb[0].mxu0 %v932
    %v1073 = vpop.f32.mrb[0].mxu0
    %v1074 = vadd.f32 0.0, %v1073
    %v1075 = vpop.f32.mrb[0].mxu0
    %v1076 = vpop.f32.mrb[0].mxu0
    %v1077 = vadd.f32 0.0, %v1076
    %v1078 = vpop.f32.mrb[0].mxu0
    %1079 = vmatprep.mubr.bf16.mxu0 0
    %1080 = vmatmul.mubr.bf16.gmra.mrb[0].mxu0 %v935
    %v1081 = vpop.f32.mrb[0].mxu0
    %v1082 = vadd.f32 0.0, %v1081
    %v1083 = vpop.f32.mrb[0].mxu0
    %v1084 = vpop.f32.mrb[0].mxu0
    %v1085 = vadd.f32 0.0, %v1084
    %v1086 = vpop.f32.mrb[0].mxu0
    %1087 = vmatprep.mubr.bf16.mxu0 0
    %1088 = vmatmul.mubr.bf16.gmra.mrb[0].mxu0 %v938
    %v1089 = vpop.f32.mrb[0].mxu0
    %v1090 = vadd.f32 0.0, %v1089
    %v1091 = vpop.f32.mrb[0].mxu0
    %v1092 = vpop.f32.mrb[0].mxu0
    %v1093 = vadd.f32 0.0, %v1092
    %v1094 = vpop.f32.mrb[0].mxu0
    %1095 = vmatprep.mubr.bf16.mxu0 0
    %1096 = vmatmul.mubr.bf16.gmra.mrb[0].mxu0 %v941
    %v1097 = vpop.f32.mrb[0].mxu0
    %v1098 = vadd.f32 0.0, %v1097
    %v1099 = vpop.f32.mrb[0].mxu0
    %v1100 = vpop.f32.mrb[0].mxu0
    %v1101 = vadd.f32 0.0, %v1100
    %v1102 = vpop.f32.mrb[0].mxu0
    %1103 = vdwg.mxu0
    %v1104 = vmul.f32 %v400, %v978
    %v1105 = vmul.f32 %v405, %v981
    %v1106 = vmul.f32 %v410, %v986
    %v1107 = vmul.f32 %v415, %v989
    %v1108 = vmul.f32 %v420, %v994
    %v1109 = vmul.f32 %v425, %v997
    %v1110 = vmul.f32 %v430, %v1002
    %v1111 = vmul.f32 %v435, %v1005
    %v1112 = vmul.f32 %v440, %v1010
    %v1113 = vmul.f32 %v445, %v1013
    %v1114 = vmul.f32 %v450, %v1018
    %v1115 = vmul.f32 %v455, %v1021
    %v1116 = vmul.f32 %v460, %v1026
    %v1117 = vmul.f32 %v465, %v1029
    %v1118 = vmul.f32 %v470, %v1034
    %v1119 = vmul.f32 %v475, %v1037
    %v1120 = vmul.f32 %v480, %v1042
    %v1121 = vmul.f32 %v485, %v1045
    %v1122 = vmul.f32 %v490, %v1050
    %v1123 = vmul.f32 %v495, %v1053
    %v1124 = vmul.f32 %v500, %v1058
    %v1125 = vmul.f32 %v505, %v1061
    %v1126 = vmul.f32 %v510, %v1066
    %v1127 = vmul.f32 %v515, %v1069
    %v1128 = vmul.f32 %v520, %v1074
    %v1129 = vmul.f32 %v525, %v1077
    %v1130 = vmul.f32 %v530, %v1082
    %v1131 = vmul.f32 %v535, %v1085
    %v1132 = vmul.f32 %v540, %v1090
    %v1133 = vmul.f32 %v545, %v1093
    %v1134 = vmul.f32 %v550, %v1098
    %v1135 = vmul.f32 %v555, %v1101
    %v1136 = vpack.c.bf16 %v1105, %v1104
    %v1137 = vpack.c.bf16 %v1107, %v1106
    %v1138 = vpack.c.bf16 %v1109, %v1108
    %v1139 = vpack.c.bf16 %v1111, %v1110
    %v1140 = vpack.c.bf16 %v1113, %v1112
    %v1141 = vpack.c.bf16 %v1115, %v1114
    %v1142 = vpack.c.bf16 %v1117, %v1116
    %v1143 = vpack.c.bf16 %v1119, %v1118
    %v1144 = vpack.c.bf16 %v1121, %v1120
    %v1145 = vpack.c.bf16 %v1123, %v1122
    %v1146 = vpack.c.bf16 %v1125, %v1124
    %v1147 = vpack.c.bf16 %v1127, %v1126
    %v1148 = vpack.c.bf16 %v1129, %v1128
    %v1149 = vpack.c.bf16 %v1131, %v1130
    %v1150 = vpack.c.bf16 %v1133, %v1132
    %v1151 = vpack.c.bf16 %v1135, %v1134
    %1152 = vmatprep.subr.bf16.mxu0 0
    %1153 = vmatpush1.bf16.msra.mxu0 %v1136
    %1154 = vmatprep.subr.bf16.mxu0 0
    %1155 = vmatpush1.bf16.msra.mxu0 %v1137
    %1156 = vmatprep.subr.bf16.mxu0 0
    %1157 = vmatpush1.bf16.msra.mxu0 %v1138
    %1158 = vmatprep.subr.bf16.mxu0 0
    %1159 = vmatpush1.bf16.msra.mxu0 %v1139
    %1160 = vmatprep.subr.bf16.mxu0 0
    %1161 = vmatpush1.bf16.msra.mxu0 %v1140
    %1162 = vmatprep.subr.bf16.mxu0 0
    %1163 = vmatpush1.bf16.msra.mxu0 %v1141
    %1164 = vmatprep.subr.bf16.mxu0 0
    %1165 = vmatpush1.bf16.msra.mxu0 %v1142
    %1166 = vmatprep.subr.bf16.mxu0 0
    %1167 = vmatpush1.bf16.msra.mxu0 %v1143
    %1168 = vmatprep.subr.bf16.mxu0 0
    %1169 = vmatpush1.bf16.msra.mxu0 %v1144
    %1170 = vmatprep.subr.bf16.mxu0 0
    %1171 = vmatpush1.bf16.msra.mxu0 %v1145
    %1172 = vmatprep.subr.bf16.mxu0 0
    %1173 = vmatpush1.bf16.msra.mxu0 %v1146
    %1174 = vmatprep.subr.bf16.mxu0 0
    %1175 = vmatpush1.bf16.msra.mxu0 %v1147
    %1176 = vmatprep.subr.bf16.mxu0 0
    %1177 = vmatpush1.bf16.msra.mxu0 %v1148
    %1178 = vmatprep.subr.bf16.mxu0 0
    %1179 = vmatpush1.bf16.msra.mxu0 %v1149
    %1180 = vmatprep.subr.bf16.mxu0 0
    %1181 = vmatpush1.bf16.msra.mxu0 %v1150
    %1182 = vmatprep.subr.bf16.mxu0 0
    %1183 = vmatpush1.bf16.msra.mxu0 %v1151
    %1184 = vmatprep.mubr.bf16.mxu0 %v45
    %1185 = vmatmul.mubr.bf16.gmra.mrb[0].mxu0 %v44
    %v1186 = vpop.f32.mrb[0].mxu0
    %v1187 = vadd.f32 0.0, %v1186
    %v1188 = vpop.f32.mrb[0].mxu0
    %v1189 = vpop.f32.mrb[0].mxu0
    %v1190 = vadd.f32 0.0, %v1189
    %v1191 = vpop.f32.mrb[0].mxu0
    %1192 = vmatprep.mubr.bf16.mxu0 %v47
    %1193 = vmatmul.mubr.bf16.gmra.mrb[0].mxu0 %v46
    %v1194 = vpop.f32.mrb[0].mxu0
    %v1195 = vadd.f32 0.0, %v1194
    %v1196 = vpop.f32.mrb[0].mxu0
    %v1197 = vpop.f32.mrb[0].mxu0
    %v1198 = vadd.f32 0.0, %v1197
    %v1199 = vpop.f32.mrb[0].mxu0
    %1200 = vmatprep.mubr.bf16.mxu0 %v49
    %1201 = vmatmul.mubr.bf16.gmra.mrb[0].mxu0 %v48
    %v1202 = vpop.f32.mrb[0].mxu0
    %v1203 = vadd.f32 0.0, %v1202
    %v1204 = vpop.f32.mrb[0].mxu0
    %v1205 = vpop.f32.mrb[0].mxu0
    %v1206 = vadd.f32 0.0, %v1205
    %v1207 = vpop.f32.mrb[0].mxu0
    %1208 = vmatprep.mubr.bf16.mxu0 %v51
    %1209 = vmatmul.mubr.bf16.gmra.mrb[0].mxu0 %v50
    %v1210 = vpop.f32.mrb[0].mxu0
    %v1211 = vadd.f32 0.0, %v1210
    %v1212 = vpop.f32.mrb[0].mxu0
    %v1213 = vpop.f32.mrb[0].mxu0
    %v1214 = vadd.f32 0.0, %v1213
    %v1215 = vpop.f32.mrb[0].mxu0
    %1216 = vmatprep.mubr.bf16.mxu0 %v53
    %1217 = vmatmul.mubr.bf16.gmra.mrb[0].mxu0 %v52
    %v1218 = vpop.f32.mrb[0].mxu0
    %v1219 = vadd.f32 0.0, %v1218
    %v1220 = vpop.f32.mrb[0].mxu0
    %v1221 = vpop.f32.mrb[0].mxu0
    %v1222 = vadd.f32 0.0, %v1221
    %v1223 = vpop.f32.mrb[0].mxu0
    %1224 = vmatprep.mubr.bf16.mxu0 %v55
    %1225 = vmatmul.mubr.bf16.gmra.mrb[0].mxu0 %v54
    %v1226 = vpop.f32.mrb[0].mxu0
    %v1227 = vadd.f32 0.0, %v1226
    %v1228 = vpop.f32.mrb[0].mxu0
    %v1229 = vpop.f32.mrb[0].mxu0
    %v1230 = vadd.f32 0.0, %v1229
    %v1231 = vpop.f32.mrb[0].mxu0
    %1232 = vmatprep.mubr.bf16.mxu0 %v57
    %1233 = vmatmul.mubr.bf16.gmra.mrb[0].mxu0 %v56
    %v1234 = vpop.f32.mrb[0].mxu0
    %v1235 = vadd.f32 0.0, %v1234
    %v1236 = vpop.f32.mrb[0].mxu0
    %v1237 = vpop.f32.mrb[0].mxu0
    %v1238 = vadd.f32 0.0, %v1237
    %v1239 = vpop.f32.mrb[0].mxu0
    %1240 = vmatprep.mubr.bf16.mxu0 %v59
    %1241 = vmatmul.mubr.bf16.gmra.mrb[0].mxu0 %v58
    %v1242 = vpop.f32.mrb[0].mxu0
    %v1243 = vadd.f32 0.0, %v1242
    %v1244 = vpop.f32.mrb[0].mxu0
    %v1245 = vpop.f32.mrb[0].mxu0
    %v1246 = vadd.f32 0.0, %v1245
    %v1247 = vpop.f32.mrb[0].mxu0
    %1248 = vmatprep.mubr.bf16.mxu0 %v61
    %1249 = vmatmul.mubr.bf16.gmra.mrb[0].mxu0 %v60
    %v1250 = vpop.f32.mrb[0].mxu0
    %v1251 = vadd.f32 0.0, %v1250
    %v1252 = vpop.f32.mrb[0].mxu0
    %v1253 = vpop.f32.mrb[0].mxu0
    %v1254 = vadd.f32 0.0, %v1253
    %v1255 = vpop.f32.mrb[0].mxu0
    %1256 = vmatprep.mubr.bf16.mxu0 %v63
    %1257 = vmatmul.mubr.bf16.gmra.mrb[0].mxu0 %v62
    %v1258 = vpop.f32.mrb[0].mxu0
    %v1259 = vadd.f32 0.0, %v1258
    %v1260 = vpop.f32.mrb[0].mxu0
    %v1261 = vpop.f32.mrb[0].mxu0
    %v1262 = vadd.f32 0.0, %v1261
    %v1263 = vpop.f32.mrb[0].mxu0
    %1264 = vmatprep.mubr.bf16.mxu0 %v65
    %1265 = vmatmul.mubr.bf16.gmra.mrb[0].mxu0 %v64
    %v1266 = vpop.f32.mrb[0].mxu0
    %v1267 = vadd.f32 0.0, %v1266
    %v1268 = vpop.f32.mrb[0].mxu0
    %v1269 = vpop.f32.mrb[0].mxu0
    %v1270 = vadd.f32 0.0, %v1269
    %v1271 = vpop.f32.mrb[0].mxu0
    %1272 = vmatprep.mubr.bf16.mxu0 %v67
    %1273 = vmatmul.mubr.bf16.gmra.mrb[0].mxu0 %v66
    %v1274 = vpop.f32.mrb[0].mxu0
    %v1275 = vadd.f32 0.0, %v1274
    %v1276 = vpop.f32.mrb[0].mxu0
    %v1277 = vpop.f32.mrb[0].mxu0
    %v1278 = vadd.f32 0.0, %v1277
    %v1279 = vpop.f32.mrb[0].mxu0
    %1280 = vmatprep.mubr.bf16.mxu0 %v69
    %1281 = vmatmul.mubr.bf16.gmra.mrb[0].mxu0 %v68
    %v1282 = vpop.f32.mrb[0].mxu0
    %v1283 = vadd.f32 0.0, %v1282
    %v1284 = vpop.f32.mrb[0].mxu0
    %v1285 = vpop.f32.mrb[0].mxu0
    %v1286 = vadd.f32 0.0, %v1285
    %v1287 = vpop.f32.mrb[0].mxu0
    %1288 = vmatprep.mubr.bf16.mxu0 %v71
    %1289 = vmatmul.mubr.bf16.gmra.mrb[0].mxu0 %v70
    %v1290 = vpop.f32.mrb[0].mxu0
    %v1291 = vadd.f32 0.0, %v1290
    %v1292 = vpop.f32.mrb[0].mxu0
    %v1293 = vpop.f32.mrb[0].mxu0
    %v1294 = vadd.f32 0.0, %v1293
    %v1295 = vpop.f32.mrb[0].mxu0
    %1296 = vmatprep.mubr.bf16.mxu0 %v73
    %1297 = vmatmul.mubr.bf16.gmra.mrb[0].mxu0 %v72
    %v1298 = vpop.f32.mrb[0].mxu0
    %v1299 = vadd.f32 0.0, %v1298
    %v1300 = vpop.f32.mrb[0].mxu0
    %v1301 = vpop.f32.mrb[0].mxu0
    %v1302 = vadd.f32 0.0, %v1301
    %v1303 = vpop.f32.mrb[0].mxu0
    %1304 = vmatprep.mubr.bf16.mxu0 %v75
    %1305 = vmatmul.mubr.bf16.gmra.mrb[0].mxu0 %v74
    %v1306 = vpop.f32.mrb[0].mxu0
    %v1307 = vadd.f32 0.0, %v1306
    %v1308 = vpop.f32.mrb[0].mxu0
    %v1309 = vpop.f32.mrb[0].mxu0
    %v1310 = vadd.f32 0.0, %v1309
    %v1311 = vpop.f32.mrb[0].mxu0
    %1312 = vdwg.mxu0
    %v1313 = vmul.f32 %v400, %v1187
    %v1314 = vmul.f32 %v405, %v1190
    %v1315 = vmul.f32 %v410, %v1195
    %v1316 = vmul.f32 %v415, %v1198
    %v1317 = vmul.f32 %v420, %v1203
    %v1318 = vmul.f32 %v425, %v1206
    %v1319 = vmul.f32 %v430, %v1211
    %v1320 = vmul.f32 %v435, %v1214
    %v1321 = vmul.f32 %v440, %v1219
    %v1322 = vmul.f32 %v445, %v1222
    %v1323 = vmul.f32 %v450, %v1227
    %v1324 = vmul.f32 %v455, %v1230
    %v1325 = vmul.f32 %v460, %v1235
    %v1326 = vmul.f32 %v465, %v1238
    %v1327 = vmul.f32 %v470, %v1243
    %v1328 = vmul.f32 %v475, %v1246
    %v1329 = vmul.f32 %v480, %v1251
    %v1330 = vmul.f32 %v485, %v1254
    %v1331 = vmul.f32 %v490, %v1259
    %v1332 = vmul.f32 %v495, %v1262
    %v1333 = vmul.f32 %v500, %v1267
    %v1334 = vmul.f32 %v505, %v1270
    %v1335 = vmul.f32 %v510, %v1275
    %v1336 = vmul.f32 %v515, %v1278
    %v1337 = vmul.f32 %v520, %v1283
    %v1338 = vmul.f32 %v525, %v1286
    %v1339 = vmul.f32 %v530, %v1291
    %v1340 = vmul.f32 %v535, %v1294
    %v1341 = vmul.f32 %v540, %v1299
    %v1342 = vmul.f32 %v545, %v1302
    %v1343 = vmul.f32 %v550, %v1307
    %v1344 = vmul.f32 %v555, %v1310
    %v1345 = vld [vmem:[%s6] sm:$0x1]
    %v1347 = vlaneseq
    %v1348 = vshrl.u32 %v1347, 7
    %v1349 = vsub.s32 0, %v1348
    %v1350 = vrot.slane %v1345, %v1349
    %v1352 = vadd.f32 %v1313, %v1350
    %v1353 = vadd.f32 %v1314, %v1350
    %v1354 = vadd.f32 %v1315, %v1350
    %v1355 = vadd.f32 %v1316, %v1350
    %v1356 = vadd.f32 %v1317, %v1350
    %v1357 = vadd.f32 %v1318, %v1350
    %v1358 = vadd.f32 %v1319, %v1350
    %v1359 = vadd.f32 %v1320, %v1350
    %v1360 = vadd.f32 %v1321, %v1350
    %v1361 = vadd.f32 %v1322, %v1350
    %v1362 = vadd.f32 %v1323, %v1350
    %v1363 = vadd.f32 %v1324, %v1350
    %v1364 = vadd.f32 %v1325, %v1350
    %v1365 = vadd.f32 %v1326, %v1350
    %v1366 = vadd.f32 %v1327, %v1350
    %v1367 = vadd.f32 %v1328, %v1350
    %v1368 = vadd.f32 %v1329, %v1350
    %v1369 = vadd.f32 %v1330, %v1350
    %v1370 = vadd.f32 %v1331, %v1350
    %v1371 = vadd.f32 %v1332, %v1350
    %v1372 = vadd.f32 %v1333, %v1350
    %v1373 = vadd.f32 %v1334, %v1350
    %v1374 = vadd.f32 %v1335, %v1350
    %v1375 = vadd.f32 %v1336, %v1350
    %v1376 = vadd.f32 %v1337, %v1350
    %v1377 = vadd.f32 %v1338, %v1350
    %v1378 = vadd.f32 %v1339, %v1350
    %v1379 = vadd.f32 %v1340, %v1350
    %v1380 = vadd.f32 %v1341, %v1350
    %v1381 = vadd.f32 %v1342, %v1350
    %v1382 = vadd.f32 %v1343, %v1350
    %v1383 = vadd.f32 %v1344, %v1350
    %v1384 = vlaneseq
    %v1385 = vand.u32 %v1384, 127
    %vm1386 = vcmp.lt.s32.totalorder %v1385, 8
    %v1387 = vsel %vm1386, %v1352, -1e+30
    %v1388 = vsel %vm1386, %v1353, -1e+30
    %v1389 = vsel %vm1386, %v1354, -1e+30
    %v1390 = vsel %vm1386, %v1355, -1e+30
    %v1391 = vsel %vm1386, %v1356, -1e+30
    %v1392 = vsel %vm1386, %v1357, -1e+30
    %v1393 = vsel %vm1386, %v1358, -1e+30
    %v1394 = vsel %vm1386, %v1359, -1e+30
    %v1395 = vsel %vm1386, %v1360, -1e+30
    %v1396 = vsel %vm1386, %v1361, -1e+30
    %v1397 = vsel %vm1386, %v1362, -1e+30
    %v1398 = vsel %vm1386, %v1363, -1e+30
    %v1399 = vsel %vm1386, %v1364, -1e+30
    %v1400 = vsel %vm1386, %v1365, -1e+30
    %v1401 = vsel %vm1386, %v1366, -1e+30
    %v1402 = vsel %vm1386, %v1367, -1e+30
    %v1403 = vsel %vm1386, %v1368, -1e+30
    %v1404 = vsel %vm1386, %v1369, -1e+30
    %v1405 = vsel %vm1386, %v1370, -1e+30
    %v1406 = vsel %vm1386, %v1371, -1e+30
    %v1407 = vsel %vm1386, %v1372, -1e+30
    %v1408 = vsel %vm1386, %v1373, -1e+30
    %v1409 = vsel %vm1386, %v1374, -1e+30
    %v1410 = vsel %vm1386, %v1375, -1e+30
    %v1411 = vsel %vm1386, %v1376, -1e+30
    %v1412 = vsel %vm1386, %v1377, -1e+30
    %v1413 = vsel %vm1386, %v1378, -1e+30
    %v1414 = vsel %vm1386, %v1379, -1e+30
    %v1415 = vsel %vm1386, %v1380, -1e+30
    %v1416 = vsel %vm1386, %v1381, -1e+30
    %v1417 = vsel %vm1386, %v1382, -1e+30
    %v1418 = vsel %vm1386, %v1383, -1e+30
    %1419 = vmax.xlane.f32.xlu0 %v1387
    %v1420 = vpop.xlane.xlu0 %1419
    %1421 = vmax.xlane.f32.xlu0 %v1388
    %v1422 = vpop.xlane.xlu0 %1421
    %1423 = vmax.xlane.f32.xlu0 %v1389
    %v1424 = vpop.xlane.xlu0 %1423
    %1425 = vmax.xlane.f32.xlu0 %v1390
    %v1426 = vpop.xlane.xlu0 %1425
    %1427 = vmax.xlane.f32.xlu0 %v1391
    %v1428 = vpop.xlane.xlu0 %1427
    %1429 = vmax.xlane.f32.xlu0 %v1392
    %v1430 = vpop.xlane.xlu0 %1429
    %1431 = vmax.xlane.f32.xlu0 %v1393
    %v1432 = vpop.xlane.xlu0 %1431
    %1433 = vmax.xlane.f32.xlu0 %v1394
    %v1434 = vpop.xlane.xlu0 %1433
    %1435 = vmax.xlane.f32.xlu0 %v1395
    %v1436 = vpop.xlane.xlu0 %1435
    %1437 = vmax.xlane.f32.xlu0 %v1396
    %v1438 = vpop.xlane.xlu0 %1437
    %1439 = vmax.xlane.f32.xlu0 %v1397
    %v1440 = vpop.xlane.xlu0 %1439
    %1441 = vmax.xlane.f32.xlu0 %v1398
    %v1442 = vpop.xlane.xlu0 %1441
    %1443 = vmax.xlane.f32.xlu0 %v1399
    %v1444 = vpop.xlane.xlu0 %1443
    %1445 = vmax.xlane.f32.xlu0 %v1400
    %v1446 = vpop.xlane.xlu0 %1445
    %1447 = vmax.xlane.f32.xlu0 %v1401
    %v1448 = vpop.xlane.xlu0 %1447
    %1449 = vmax.xlane.f32.xlu0 %v1402
    %v1450 = vpop.xlane.xlu0 %1449
    %1451 = vmax.xlane.f32.xlu0 %v1403
    %v1452 = vpop.xlane.xlu0 %1451
    %1453 = vmax.xlane.f32.xlu0 %v1404
    %v1454 = vpop.xlane.xlu0 %1453
    %1455 = vmax.xlane.f32.xlu0 %v1405
    %v1456 = vpop.xlane.xlu0 %1455
    %1457 = vmax.xlane.f32.xlu0 %v1406
    %v1458 = vpop.xlane.xlu0 %1457
    %1459 = vmax.xlane.f32.xlu0 %v1407
    %v1460 = vpop.xlane.xlu0 %1459
    %1461 = vmax.xlane.f32.xlu0 %v1408
    %v1462 = vpop.xlane.xlu0 %1461
    %1463 = vmax.xlane.f32.xlu0 %v1409
    %v1464 = vpop.xlane.xlu0 %1463
    %1465 = vmax.xlane.f32.xlu0 %v1410
    %v1466 = vpop.xlane.xlu0 %1465
    %1467 = vmax.xlane.f32.xlu0 %v1411
    %v1468 = vpop.xlane.xlu0 %1467
    %1469 = vmax.xlane.f32.xlu0 %v1412
    %v1470 = vpop.xlane.xlu0 %1469
    %1471 = vmax.xlane.f32.xlu0 %v1413
    %v1472 = vpop.xlane.xlu0 %1471
    %1473 = vmax.xlane.f32.xlu0 %v1414
    %v1474 = vpop.xlane.xlu0 %1473
    %1475 = vmax.xlane.f32.xlu0 %v1415
    %v1476 = vpop.xlane.xlu0 %1475
    %1477 = vmax.xlane.f32.xlu0 %v1416
    %v1478 = vpop.xlane.xlu0 %1477
    %1479 = vmax.xlane.f32.xlu0 %v1417
    %v1480 = vpop.xlane.xlu0 %1479
    %1481 = vmax.xlane.f32.xlu0 %v1418
    %v1482 = vpop.xlane.xlu0 %1481
    %v1483 = vsub.f32 %v1387, %v1420
    %v1484 = vsub.f32 %v1388, %v1422
    %v1485 = vsub.f32 %v1389, %v1424
    %v1486 = vsub.f32 %v1390, %v1426
    %v1487 = vsub.f32 %v1391, %v1428
    %v1488 = vsub.f32 %v1392, %v1430
    %v1489 = vsub.f32 %v1393, %v1432
    %v1490 = vsub.f32 %v1394, %v1434
    %v1491 = vsub.f32 %v1395, %v1436
    %v1492 = vsub.f32 %v1396, %v1438
    %v1493 = vsub.f32 %v1397, %v1440
    %v1494 = vsub.f32 %v1398, %v1442
    %v1495 = vsub.f32 %v1399, %v1444
    %v1496 = vsub.f32 %v1400, %v1446
    %v1497 = vsub.f32 %v1401, %v1448
    %v1498 = vsub.f32 %v1402, %v1450
    %v1499 = vsub.f32 %v1403, %v1452
    %v1500 = vsub.f32 %v1404, %v1454
    %v1501 = vsub.f32 %v1405, %v1456
    %v1502 = vsub.f32 %v1406, %v1458
    %v1503 = vsub.f32 %v1407, %v1460
    %v1504 = vsub.f32 %v1408, %v1462
    %v1505 = vsub.f32 %v1409, %v1464
    %v1506 = vsub.f32 %v1410, %v1466
    %v1507 = vsub.f32 %v1411, %v1468
    %v1508 = vsub.f32 %v1412, %v1470
    %v1509 = vsub.f32 %v1413, %v1472
    %v1510 = vsub.f32 %v1414, %v1474
    %v1511 = vsub.f32 %v1415, %v1476
    %v1512 = vsub.f32 %v1416, %v1478
    %v1513 = vsub.f32 %v1417, %v1480
    %v1514 = vsub.f32 %v1418, %v1482
    %v1515 = vmul.f32 %v1483, 1.442695
    %v1516 = vpow.pop %v1515
    %v1517 = vmul.f32 %v1484, 1.442695
    %v1518 = vpow.pop %v1517
    %v1519 = vmul.f32 %v1485, 1.442695
    %v1520 = vpow.pop %v1519
    %v1521 = vmul.f32 %v1486, 1.442695
    %v1522 = vpow.pop %v1521
    %v1523 = vmul.f32 %v1487, 1.442695
    %v1524 = vpow.pop %v1523
    %v1525 = vmul.f32 %v1488, 1.442695
    %v1526 = vpow.pop %v1525
    %v1527 = vmul.f32 %v1489, 1.442695
    %v1528 = vpow.pop %v1527
    %v1529 = vmul.f32 %v1490, 1.442695
    %v1530 = vpow.pop %v1529
    %v1531 = vmul.f32 %v1491, 1.442695
    %v1532 = vpow.pop %v1531
    %v1533 = vmul.f32 %v1492, 1.442695
    %v1534 = vpow.pop %v1533
    %v1535 = vmul.f32 %v1493, 1.442695
    %v1536 = vpow.pop %v1535
    %v1537 = vmul.f32 %v1494, 1.442695
    %v1538 = vpow.pop %v1537
    %v1539 = vmul.f32 %v1495, 1.442695
    %v1540 = vpow.pop %v1539
    %v1541 = vmul.f32 %v1496, 1.442695
    %v1542 = vpow.pop %v1541
    %v1543 = vmul.f32 %v1497, 1.442695
    %v1544 = vpow.pop %v1543
    %v1545 = vmul.f32 %v1498, 1.442695
    %v1546 = vpow.pop %v1545
    %v1547 = vmul.f32 %v1499, 1.442695
    %v1548 = vpow.pop %v1547
    %v1549 = vmul.f32 %v1500, 1.442695
    %v1550 = vpow.pop %v1549
    %v1551 = vmul.f32 %v1501, 1.442695
    %v1552 = vpow.pop %v1551
    %v1553 = vmul.f32 %v1502, 1.442695
    %v1554 = vpow.pop %v1553
    %v1555 = vmul.f32 %v1503, 1.442695
    %v1556 = vpow.pop %v1555
    %v1557 = vmul.f32 %v1504, 1.442695
    %v1558 = vpow.pop %v1557
    %v1559 = vmul.f32 %v1505, 1.442695
    %v1560 = vpow.pop %v1559
    %v1561 = vmul.f32 %v1506, 1.442695
    %v1562 = vpow.pop %v1561
    %v1563 = vmul.f32 %v1507, 1.442695
    %v1564 = vpow.pop %v1563
    %v1565 = vmul.f32 %v1508, 1.442695
    %v1566 = vpow.pop %v1565
    %v1567 = vmul.f32 %v1509, 1.442695
    %v1568 = vpow.pop %v1567
    %v1569 = vmul.f32 %v1510, 1.442695
    %v1570 = vpow.pop %v1569
    %v1571 = vmul.f32 %v1511, 1.442695
    %v1572 = vpow.pop %v1571
    %v1573 = vmul.f32 %v1512, 1.442695
    %v1574 = vpow.pop %v1573
    %v1575 = vmul.f32 %v1513, 1.442695
    %v1576 = vpow.pop %v1575
    %v1577 = vmul.f32 %v1514, 1.442695
    %v1578 = vpow.pop %v1577
    %v1579 = vsel %vm1386, %v1516, 0.0
    %v1580 = vsel %vm1386, %v1518, 0.0
    %v1581 = vsel %vm1386, %v1520, 0.0
    %v1582 = vsel %vm1386, %v1522, 0.0
    %v1583 = vsel %vm1386, %v1524, 0.0
    %v1584 = vsel %vm1386, %v1526, 0.0
    %v1585 = vsel %vm1386, %v1528, 0.0
    %v1586 = vsel %vm1386, %v1530, 0.0
    %v1587 = vsel %vm1386, %v1532, 0.0
    %v1588 = vsel %vm1386, %v1534, 0.0
    %v1589 = vsel %vm1386, %v1536, 0.0
    %v1590 = vsel %vm1386, %v1538, 0.0
    %v1591 = vsel %vm1386, %v1540, 0.0
    %v1592 = vsel %vm1386, %v1542, 0.0
    %v1593 = vsel %vm1386, %v1544, 0.0
    %v1594 = vsel %vm1386, %v1546, 0.0
    %v1595 = vsel %vm1386, %v1548, 0.0
    %v1596 = vsel %vm1386, %v1550, 0.0
    %v1597 = vsel %vm1386, %v1552, 0.0
    %v1598 = vsel %vm1386, %v1554, 0.0
    %v1599 = vsel %vm1386, %v1556, 0.0
    %v1600 = vsel %vm1386, %v1558, 0.0
    %v1601 = vsel %vm1386, %v1560, 0.0
    %v1602 = vsel %vm1386, %v1562, 0.0
    %v1603 = vsel %vm1386, %v1564, 0.0
    %v1604 = vsel %vm1386, %v1566, 0.0
    %v1605 = vsel %vm1386, %v1568, 0.0
    %v1606 = vsel %vm1386, %v1570, 0.0
    %v1607 = vsel %vm1386, %v1572, 0.0
    %v1608 = vsel %vm1386, %v1574, 0.0
    %v1609 = vsel %vm1386, %v1576, 0.0
    %v1610 = vsel %vm1386, %v1578, 0.0
    %1611 = vadd.xlane.f32.xlu0 %v1579
    %v1612 = vpop.xlane.xlu0 %1611
    %1613 = vadd.xlane.f32.xlu0 %v1580
    %v1614 = vpop.xlane.xlu0 %1613
    %1615 = vadd.xlane.f32.xlu0 %v1581
    %v1616 = vpop.xlane.xlu0 %1615
    %1617 = vadd.xlane.f32.xlu0 %v1582
    %v1618 = vpop.xlane.xlu0 %1617
    %1619 = vadd.xlane.f32.xlu0 %v1583
    %v1620 = vpop.xlane.xlu0 %1619
    %1621 = vadd.xlane.f32.xlu0 %v1584
    %v1622 = vpop.xlane.xlu0 %1621
    %1623 = vadd.xlane.f32.xlu0 %v1585
    %v1624 = vpop.xlane.xlu0 %1623
    %1625 = vadd.xlane.f32.xlu0 %v1586
    %v1626 = vpop.xlane.xlu0 %1625
    %1627 = vadd.xlane.f32.xlu0 %v1587
    %v1628 = vpop.xlane.xlu0 %1627
    %1629 = vadd.xlane.f32.xlu0 %v1588
    %v1630 = vpop.xlane.xlu0 %1629
    %1631 = vadd.xlane.f32.xlu0 %v1589
    %v1632 = vpop.xlane.xlu0 %1631
    %1633 = vadd.xlane.f32.xlu0 %v1590
    %v1634 = vpop.xlane.xlu0 %1633
    %1635 = vadd.xlane.f32.xlu0 %v1591
    %v1636 = vpop.xlane.xlu0 %1635
    %1637 = vadd.xlane.f32.xlu0 %v1592
    %v1638 = vpop.xlane.xlu0 %1637
    %1639 = vadd.xlane.f32.xlu0 %v1593
    %v1640 = vpop.xlane.xlu0 %1639
    %1641 = vadd.xlane.f32.xlu0 %v1594
    %v1642 = vpop.xlane.xlu0 %1641
    %1643 = vadd.xlane.f32.xlu0 %v1595
    %v1644 = vpop.xlane.xlu0 %1643
    %1645 = vadd.xlane.f32.xlu0 %v1596
    %v1646 = vpop.xlane.xlu0 %1645
    %1647 = vadd.xlane.f32.xlu0 %v1597
    %v1648 = vpop.xlane.xlu0 %1647
    %1649 = vadd.xlane.f32.xlu0 %v1598
    %v1650 = vpop.xlane.xlu0 %1649
    %1651 = vadd.xlane.f32.xlu0 %v1599
    %v1652 = vpop.xlane.xlu0 %1651
    %1653 = vadd.xlane.f32.xlu0 %v1600
    %v1654 = vpop.xlane.xlu0 %1653
    %1655 = vadd.xlane.f32.xlu0 %v1601
    %v1656 = vpop.xlane.xlu0 %1655
    %1657 = vadd.xlane.f32.xlu0 %v1602
    %v1658 = vpop.xlane.xlu0 %1657
    %1659 = vadd.xlane.f32.xlu0 %v1603
    %v1660 = vpop.xlane.xlu0 %1659
    %1661 = vadd.xlane.f32.xlu0 %v1604
    %v1662 = vpop.xlane.xlu0 %1661
    %1663 = vadd.xlane.f32.xlu0 %v1605
    %v1664 = vpop.xlane.xlu0 %1663
    %1665 = vadd.xlane.f32.xlu0 %v1606
    %v1666 = vpop.xlane.xlu0 %1665
    %1667 = vadd.xlane.f32.xlu0 %v1607
    %v1668 = vpop.xlane.xlu0 %1667
    %1669 = vadd.xlane.f32.xlu0 %v1608
    %v1670 = vpop.xlane.xlu0 %1669
    %1671 = vadd.xlane.f32.xlu0 %v1609
    %v1672 = vpop.xlane.xlu0 %1671
    %1673 = vadd.xlane.f32.xlu0 %v1610
    %v1674 = vpop.xlane.xlu0 %1673
    %v1675 = vlog2.pop %v1612
    %v1676 = vmul.f32 %v1675, 0.6931472
    %v1677 = vlog2.pop %v1614
    %v1678 = vmul.f32 %v1677, 0.6931472
    %v1679 = vlog2.pop %v1616
    %v1680 = vmul.f32 %v1679, 0.6931472
    %v1681 = vlog2.pop %v1618
    %v1682 = vmul.f32 %v1681, 0.6931472
    %v1683 = vlog2.pop %v1620
    %v1684 = vmul.f32 %v1683, 0.6931472
    %v1685 = vlog2.pop %v1622
    %v1686 = vmul.f32 %v1685, 0.6931472
    %v1687 = vlog2.pop %v1624
    %v1688 = vmul.f32 %v1687, 0.6931472
    %v1689 = vlog2.pop %v1626
    %v1690 = vmul.f32 %v1689, 0.6931472
    %v1691 = vlog2.pop %v1628
    %v1692 = vmul.f32 %v1691, 0.6931472
    %v1693 = vlog2.pop %v1630
    %v1694 = vmul.f32 %v1693, 0.6931472
    %v1695 = vlog2.pop %v1632
    %v1696 = vmul.f32 %v1695, 0.6931472
    %v1697 = vlog2.pop %v1634
    %v1698 = vmul.f32 %v1697, 0.6931472
    %v1699 = vlog2.pop %v1636
    %v1700 = vmul.f32 %v1699, 0.6931472
    %v1701 = vlog2.pop %v1638
    %v1702 = vmul.f32 %v1701, 0.6931472
    %v1703 = vlog2.pop %v1640
    %v1704 = vmul.f32 %v1703, 0.6931472
    %v1705 = vlog2.pop %v1642
    %v1706 = vmul.f32 %v1705, 0.6931472
    %v1707 = vlog2.pop %v1644
    %v1708 = vmul.f32 %v1707, 0.6931472
    %v1709 = vlog2.pop %v1646
    %v1710 = vmul.f32 %v1709, 0.6931472
    %v1711 = vlog2.pop %v1648
    %v1712 = vmul.f32 %v1711, 0.6931472
    %v1713 = vlog2.pop %v1650
    %v1714 = vmul.f32 %v1713, 0.6931472
    %v1715 = vlog2.pop %v1652
    %v1716 = vmul.f32 %v1715, 0.6931472
    %v1717 = vlog2.pop %v1654
    %v1718 = vmul.f32 %v1717, 0.6931472
    %v1719 = vlog2.pop %v1656
    %v1720 = vmul.f32 %v1719, 0.6931472
    %v1721 = vlog2.pop %v1658
    %v1722 = vmul.f32 %v1721, 0.6931472
    %v1723 = vlog2.pop %v1660
    %v1724 = vmul.f32 %v1723, 0.6931472
    %v1725 = vlog2.pop %v1662
    %v1726 = vmul.f32 %v1725, 0.6931472
    %v1727 = vlog2.pop %v1664
    %v1728 = vmul.f32 %v1727, 0.6931472
    %v1729 = vlog2.pop %v1666
    %v1730 = vmul.f32 %v1729, 0.6931472
    %v1731 = vlog2.pop %v1668
    %v1732 = vmul.f32 %v1731, 0.6931472
    %v1733 = vlog2.pop %v1670
    %v1734 = vmul.f32 %v1733, 0.6931472
    %v1735 = vlog2.pop %v1672
    %v1736 = vmul.f32 %v1735, 0.6931472
    %v1737 = vlog2.pop %v1674
    %v1738 = vmul.f32 %v1737, 0.6931472
    %v1739 = vsub.f32 %v1483, %v1676
    %v1740 = vsub.f32 %v1484, %v1678
    %v1741 = vsub.f32 %v1485, %v1680
    %v1742 = vsub.f32 %v1486, %v1682
    %v1743 = vsub.f32 %v1487, %v1684
    %v1744 = vsub.f32 %v1488, %v1686
    %v1745 = vsub.f32 %v1489, %v1688
    %v1746 = vsub.f32 %v1490, %v1690
    %v1747 = vsub.f32 %v1491, %v1692
    %v1748 = vsub.f32 %v1492, %v1694
    %v1749 = vsub.f32 %v1493, %v1696
    %v1750 = vsub.f32 %v1494, %v1698
    %v1751 = vsub.f32 %v1495, %v1700
    %v1752 = vsub.f32 %v1496, %v1702
    %v1753 = vsub.f32 %v1497, %v1704
    %v1754 = vsub.f32 %v1498, %v1706
    %v1755 = vsub.f32 %v1499, %v1708
    %v1756 = vsub.f32 %v1500, %v1710
    %v1757 = vsub.f32 %v1501, %v1712
    %v1758 = vsub.f32 %v1502, %v1714
    %v1759 = vsub.f32 %v1503, %v1716
    %v1760 = vsub.f32 %v1504, %v1718
    %v1761 = vsub.f32 %v1505, %v1720
    %v1762 = vsub.f32 %v1506, %v1722
    %v1763 = vsub.f32 %v1507, %v1724
    %v1764 = vsub.f32 %v1508, %v1726
    %v1765 = vsub.f32 %v1509, %v1728
    %v1766 = vsub.f32 %v1510, %v1730
    %v1767 = vsub.f32 %v1511, %v1732
    %v1768 = vsub.f32 %v1512, %v1734
    %v1769 = vsub.f32 %v1513, %v1736
    %v1770 = vsub.f32 %v1514, %v1738
    %v1771 = vsel %vm1386, %v1739, 0.0
    %v1772 = vsel %vm1386, %v1740, 0.0
    %v1773 = vsel %vm1386, %v1741, 0.0
    %v1774 = vsel %vm1386, %v1742, 0.0
    %v1775 = vsel %vm1386, %v1743, 0.0
    %v1776 = vsel %vm1386, %v1744, 0.0
    %v1777 = vsel %vm1386, %v1745, 0.0
    %v1778 = vsel %vm1386, %v1746, 0.0
    %v1779 = vsel %vm1386, %v1747, 0.0
    %v1780 = vsel %vm1386, %v1748, 0.0
    %v1781 = vsel %vm1386, %v1749, 0.0
    %v1782 = vsel %vm1386, %v1750, 0.0
    %v1783 = vsel %vm1386, %v1751, 0.0
    %v1784 = vsel %vm1386, %v1752, 0.0
    %v1785 = vsel %vm1386, %v1753, 0.0
    %v1786 = vsel %vm1386, %v1754, 0.0
    %v1787 = vsel %vm1386, %v1755, 0.0
    %v1788 = vsel %vm1386, %v1756, 0.0
    %v1789 = vsel %vm1386, %v1757, 0.0
    %v1790 = vsel %vm1386, %v1758, 0.0
    %v1791 = vsel %vm1386, %v1759, 0.0
    %v1792 = vsel %vm1386, %v1760, 0.0
    %v1793 = vsel %vm1386, %v1761, 0.0
    %v1794 = vsel %vm1386, %v1762, 0.0
    %v1795 = vsel %vm1386, %v1763, 0.0
    %v1796 = vsel %vm1386, %v1764, 0.0
    %v1797 = vsel %vm1386, %v1765, 0.0
    %v1798 = vsel %vm1386, %v1766, 0.0
    %v1799 = vsel %vm1386, %v1767, 0.0
    %v1800 = vsel %vm1386, %v1768, 0.0
    %v1801 = vsel %vm1386, %v1769, 0.0
    %v1802 = vsel %vm1386, %v1770, 0.0
    %1803 = vst [vmem:[#allocation2] sm:$0xff] %v1771
    %1804 = vst [vmem:[#allocation2 + $0x8] sm:$0xff] %v1772
    %1805 = vst [vmem:[#allocation2 + $0x10] sm:$0xff] %v1773
    %1806 = vst [vmem:[#allocation2 + $0x18] sm:$0xff] %v1774
    %1807 = vst [vmem:[#allocation2 + $0x20] sm:$0xff] %v1775
    %1808 = vst [vmem:[#allocation2 + $0x28] sm:$0xff] %v1776
    %1809 = vst [vmem:[#allocation2 + $0x30] sm:$0xff] %v1777
    %1810 = vst [vmem:[#allocation2 + $0x38] sm:$0xff] %v1778
    %1811 = vst [vmem:[#allocation2 + $0x40] sm:$0xff] %v1779
    %1812 = vst [vmem:[#allocation2 + $0x48] sm:$0xff] %v1780
    %1813 = vst [vmem:[#allocation2 + $0x50] sm:$0xff] %v1781
    %1814 = vst [vmem:[#allocation2 + $0x58] sm:$0xff] %v1782
    %1815 = vst [vmem:[#allocation2 + $0x60] sm:$0xff] %v1783
    %1816 = vst [vmem:[#allocation2 + $0x68] sm:$0xff] %v1784
    %1817 = vst [vmem:[#allocation2 + $0x70] sm:$0xff] %v1785
    %1818 = vst [vmem:[#allocation2 + $0x78] sm:$0xff] %v1786
    %1819 = vst [vmem:[#allocation2 + $0x80] sm:$0xff] %v1787
    %1820 = vst [vmem:[#allocation2 + $0x88] sm:$0xff] %v1788
    %1821 = vst [vmem:[#allocation2 + $0x90] sm:$0xff] %v1789
    %1822 = vst [vmem:[#allocation2 + $0x98] sm:$0xff] %v1790
    %1823 = vst [vmem:[#allocation2 + $0xa0] sm:$0xff] %v1791
    %1824 = vst [vmem:[#allocation2 + $0xa8] sm:$0xff] %v1792
    %1825 = vst [vmem:[#allocation2 + $0xb0] sm:$0xff] %v1793
    %1826 = vst [vmem:[#allocation2 + $0xb8] sm:$0xff] %v1794
    %1827 = vst [vmem:[#allocation2 + $0xc0] sm:$0xff] %v1795
    %1828 = vst [vmem:[#allocation2 + $0xc8] sm:$0xff] %v1796
    %1829 = vst [vmem:[#allocation2 + $0xd0] sm:$0xff] %v1797
    %1830 = vst [vmem:[#allocation2 + $0xd8] sm:$0xff] %v1798
    %1831 = vst [vmem:[#allocation2 + $0xe0] sm:$0xff] %v1799
    %1832 = vst [vmem:[#allocation2 + $0xe8] sm:$0xff] %v1800
    %1833 = vst [vmem:[#allocation2 + $0xf0] sm:$0xff] %v1801
    %1834 = vst [vmem:[#allocation2 + $0xf8] sm:$0xff] %v1802
    // Predicated region
    $region30: #{tpu_custom_call.1} parent=1 // pred_check
      _
    $region31: #{tpu_custom_call.1} parent=1 // pred_check_branch
      %1836 = sbr.rel (0) target = $region33
    $region32: #{tpu_custom_call.1} parent=1 // pred_region
      %s1838 = ssub.s32 4096, 4096
      %1839 = vsyncadd [#allocation3], %s1838
      %s1840 = sshll.u32 [#allocation2], 4
      %s1841 = int_to_ptr.vmem [resolvable:$true] %s1840
      %1846 = dma.vmem_to_hbm [thread:$0]  %s1841, 4096, %s7, [#allocation3], 128, 128, 8
    $region33: #{tpu_custom_call.1} parent=1 // pred_fallthru
      _
    // Predicated region
    $region34: #{tpu_custom_call.1} parent=1 // pred_check
      _
    $region35: #{tpu_custom_call.1} parent=1 // pred_check_branch
      %1848 = sbr.rel (0) target = $region37
    $region36: #{tpu_custom_call.1} parent=1 // pred_region
      %1849 = dma.done [#allocation3], 4096
    $region37: #{tpu_custom_call.1} parent=1 // pred_fallthru
      _
    %1850 = vsyncpa [#allocation3], 1

</llo_original>
